<compile_context>
chip_gen: v7x
topology: tpu7x:2x2x1
jax: 0.10.0
libtpu: 0.0.40
codegen_flags: <defaults>
</compile_context>

<pallas_src>
import functools
import math

import jax
import jax.numpy as jnp
import numpy as np
from jax.experimental import pallas as pl
from jax.experimental.pallas import tpu as pltpu


def _upsample_conv_kernel(x_ref, w_ref, mask_ref, bias_ref, out_ref, *, C, W, HW):
    """Per-batch kernel.

    x_ref    : (1, C, HW)      VMEM  input, spatial flattened (lane dim = HW)
    w_ref    : (4, 4, C, C)    VMEM  [phase=a*2+b, tap=r*2+s, co, ci] eff. weights
    mask_ref : (9, 1, HW)      VMEM  border-validity masks per (dh, dw) tap
    bias_ref : (C, 1)          VMEM  conv bias
    out_ref  : (1, 4, C, HW)         out[0, a*2+b, co, h*W+w] = y[co, 2h+a, 2w+b]
    """
    x = x_ref[0]                                   # (C, HW) f32
    bias = bias_ref[...]                           # (C, 1)

    # Stage the 9 shifted slabs once (shared across phases).  Circular roll on
    # the flattened spatial axis + a precomputed mask implements the shifted,
    # zero-padded window:  slab[ci, h*W+w] = x[ci, h+dh, w+dw]  (0 outside).
    slabs = {}
    for dh in (-1, 0, 1):
        for dw in (-1, 0, 1):
            k = dh * W + dw
            if k == 0:
                slabs[(dh, dw)] = x                # center tap: no shift, all valid
            else:
                t = (dh + 1) * 3 + (dw + 1)
                slabs[(dh, dw)] = pltpu.roll(x, (-k) % HW, axis=1) * mask_ref[t]

    # Per-phase contraction on the MXU: acc[co, n] += W_eff[co, ci] @ slab[ci, n]
    for p, (a, b) in enumerate(((0, 0), (0, 1), (1, 0), (1, 1))):
        acc = jnp.zeros((C, HW), jnp.float32)
        for r in range(2):
            for s in range(2):
                acc = acc + jnp.dot(
                    w_ref[p, r * 2 + s],           # (C, C)
                    slabs[(a + r - 1, b + s - 1)], # (C, HW)
                    preferred_element_type=jnp.float32)
        out_ref[0, p] = acc + bias


def upsample_forward(x, weight, bias):
    """x: (N, C, H, W) f32; weight: (C, C, 3, 3) OIHW; bias: (C,). -> (N, C, 2H, 2W)."""
    N, C, H, W = x.shape
    HW = H * W

    # Fold nearest-2x upsample into per-phase effective 2x2 weights (param glue).
    #   a=0: taps dh=-1 -> w[0], dh=0 -> w[1]+w[2]
    #   a=1: taps dh= 0 -> w[0]+w[1], dh=+1 -> w[2]
    R = jnp.array([[[1., 0., 0.],
                    [0., 1., 1.]],
                   [[1., 1., 0.],
                    [0., 0., 1.]]], dtype=jnp.float32)           # [a, r, kh]
    weff = jnp.einsum('ark,bsl,oikl->abrsoi', R, R, weight,
                      precision=jax.lax.Precision.HIGHEST)        # (2,2,2,2,C,C)
    weff = weff.reshape(4, 4, C, C).astype(jnp.float32)           # [phase, tap, co, ci]

    # Precompute border-validity masks for the 9 (dh, dw) taps on the
    # flattened spatial axis (tiny constant, lives in VMEM).
    nidx = np.arange(HW)
    hh, ww = nidx // W, nidx % W
    masks_np = np.zeros((9, 1, HW), np.float32)
    for dh in (-1, 0, 1):
        for dw in (-1, 0, 1):
            t = (dh + 1) * 3 + (dw + 1)
            valid = ((hh + dh >= 0) & (hh + dh < H) &
                     (ww + dw >= 0) & (ww + dw < W))
            masks_np[t, 0, :] = valid.astype(np.float32)
    masks = jnp.asarray(masks_np)

    x_flat = x.reshape(N, C, HW)                 # free (contiguous) reshape
    bias2d = bias.reshape(C, 1).astype(jnp.float32)

    kernel = functools.partial(_upsample_conv_kernel, C=C, W=W, HW=HW)

    phases = pl.pallas_call(
        kernel,
        out_shape=jax.ShapeDtypeStruct((N, 4, C, HW), jnp.float32),
        grid=(N,),
        in_specs=[
            pl.BlockSpec((1, C, HW), lambda n: (n, 0, 0)),
            pl.BlockSpec((4, 4, C, C), lambda n: (0, 0, 0, 0)),
            pl.BlockSpec((9, 1, HW), lambda n: (0, 0, 0)),
            pl.BlockSpec((C, 1), lambda n: (0, 0)),
        ],
        out_specs=pl.BlockSpec((1, 4, C, HW), lambda n: (n, 0, 0, 0)),
        compiler_params=pltpu.CompilerParams(
            dimension_semantics=("parallel",)),
    )(x_flat, weff, masks, bias2d)

    # Depth-to-space glue: phases[n, a*2+b, co, h*W+w] -> y[n, co, 2h+a, 2w+b].
    out = phases.reshape(N, 2, 2, C, H, W)
    out = jnp.transpose(out, (0, 3, 4, 1, 5, 2)).reshape(N, C, 2 * H, 2 * W)
    return out


def _reference_forward(x, weight, bias):
    """Pure-JAX reference: nearest 2x upsample + 3x3 'same' conv (NCHW)."""
    up = jnp.repeat(jnp.repeat(x, 2, axis=2), 2, axis=3)
    y = jax.lax.conv_general_dilated(
        up, weight, window_strides=(1, 1), padding=((1, 1), (1, 1)),
        dimension_numbers=('NCHW', 'OIHW', 'NCHW'),
        precision=jax.lax.Precision.HIGHEST)
    return y + bias[None, :, None, None]


if __name__ == "__main__":
    N, C, H, W = 2, 4, 16, 16

    key = jax.random.PRNGKey(0)
    kx, kw, kb = jax.random.split(key, 3)

    x = jax.random.normal(kx, (N, C, H, W), dtype=jnp.float32)

    # Deterministic Conv2d-style init (uniform in +/- 1/sqrt(fan_in)).
    fan_in = C * 3 * 3
    bound = 1.0 / math.sqrt(fan_in)
    weight = jax.random.uniform(kw, (C, C, 3, 3), jnp.float32, -bound, bound)
    bias = jax.random.uniform(kb, (C,), jnp.float32, -bound, bound)

    y = upsample_forward(x, weight, bias)
    y = jax.block_until_ready(y)

    y_ref = jax.block_until_ready(_reference_forward(x, weight, bias))

    assert y.shape == (N, C, 2 * H, 2 * W), y.shape
    np.testing.assert_allclose(np.asarray(y), np.asarray(y_ref),
                               rtol=1e-4, atol=1e-4)

    print("KERNEL_OK")
</pallas_src>

<mosaic_0001>
module attributes {stable_mosaic.version = 11 : i64} {
  func.func @_upsample_conv_kernel(%arg0: i32, %arg1: memref<1x4x256xf32, #tpu.memory_space<vmem>>, %arg2: memref<4x4x4x4xf32, #tpu.memory_space<vmem>>, %arg3: memref<9x1x256xf32, #tpu.memory_space<vmem>>, %arg4: memref<4x1xf32, #tpu.memory_space<vmem>>, %arg5: memref<1x4x4x256xf32, #tpu.memory_space<vmem>>) attributes {dimension_semantics = [#tpu.dimension_semantics<parallel>], iteration_bounds = array<i64: 2>, scalar_prefetch = 0 : i64, scratch_operands = 0 : i64, tpu.core_type = #tpu.core_type<tc>, window_params = [{transform_indices = @transform_0, window_bounds = array<i64: 1, 4, 256>}, {pipeline_mode = #tpu.pipeline_mode<synchronous>, transform_indices = @transform_1, window_bounds = array<i64: 4, 4, 4, 4>}, {pipeline_mode = #tpu.pipeline_mode<synchronous>, transform_indices = @transform_2, window_bounds = array<i64: 9, 1, 256>}, {pipeline_mode = #tpu.pipeline_mode<synchronous>, transform_indices = @transform_3, window_bounds = array<i64: 4, 1>}, {transform_indices = @transform_4, window_bounds = array<i64: 1, 4, 4, 256>}]} {
    %c0 = arith.constant 0 : index
    %c0_0 = arith.constant 0 : index
    %c0_1 = arith.constant 0 : index
    %0 = vector.load %arg1[%c0, %c0_0, %c0_1] : memref<1x4x256xf32, #tpu.memory_space<vmem>>, vector<1x4x256xf32>
    %1 = vector.shape_cast %0 : vector<1x4x256xf32> to vector<4x256xf32>
    %c0_2 = arith.constant 0 : index
    %c0_3 = arith.constant 0 : index
    %2 = vector.load %arg4[%c0_2, %c0_3] : memref<4x1xf32, #tpu.memory_space<vmem>>, vector<4x1xf32>
    %c17_i32 = arith.constant 17 : i32
    %3 = tpu.dynamic_rotate %1 by %c17_i32 dim 1 : vector<4x256xf32>, i32 -> vector<4x256xf32>
    %c0_4 = arith.constant 0 : index
    %c0_5 = arith.constant 0 : index
    %c0_6 = arith.constant 0 : index
    %4 = vector.load %arg3[%c0_4, %c0_5, %c0_6] : memref<9x1x256xf32, #tpu.memory_space<vmem>>, vector<1x1x256xf32>
    %5 = vector.shape_cast %4 : vector<1x1x256xf32> to vector<1x256xf32>
    %6 = vector.broadcast %5 : vector<1x256xf32> to vector<4x256xf32>
    %7 = arith.mulf %3, %6 : vector<4x256xf32>
    %c16_i32 = arith.constant 16 : i32
    %8 = tpu.dynamic_rotate %1 by %c16_i32 dim 1 : vector<4x256xf32>, i32 -> vector<4x256xf32>
    %c1 = arith.constant 1 : index
    %c0_7 = arith.constant 0 : index
    %c0_8 = arith.constant 0 : index
    %9 = vector.load %arg3[%c1, %c0_7, %c0_8] : memref<9x1x256xf32, #tpu.memory_space<vmem>>, vector<1x1x256xf32>
    %10 = vector.shape_cast %9 : vector<1x1x256xf32> to vector<1x256xf32>
    %11 = vector.broadcast %10 : vector<1x256xf32> to vector<4x256xf32>
    %12 = arith.mulf %8, %11 : vector<4x256xf32>
    %c15_i32 = arith.constant 15 : i32
    %13 = tpu.dynamic_rotate %1 by %c15_i32 dim 1 : vector<4x256xf32>, i32 -> vector<4x256xf32>
    %c2 = arith.constant 2 : index
    %c0_9 = arith.constant 0 : index
    %c0_10 = arith.constant 0 : index
    %14 = vector.load %arg3[%c2, %c0_9, %c0_10] : memref<9x1x256xf32, #tpu.memory_space<vmem>>, vector<1x1x256xf32>
    %15 = vector.shape_cast %14 : vector<1x1x256xf32> to vector<1x256xf32>
    %16 = vector.broadcast %15 : vector<1x256xf32> to vector<4x256xf32>
    %17 = arith.mulf %13, %16 : vector<4x256xf32>
    %c1_i32 = arith.constant 1 : i32
    %18 = tpu.dynamic_rotate %1 by %c1_i32 dim 1 : vector<4x256xf32>, i32 -> vector<4x256xf32>
    %c3 = arith.constant 3 : index
    %c0_11 = arith.constant 0 : index
    %c0_12 = arith.constant 0 : index
    %19 = vector.load %arg3[%c3, %c0_11, %c0_12] : memref<9x1x256xf32, #tpu.memory_space<vmem>>, vector<1x1x256xf32>
    %20 = vector.shape_cast %19 : vector<1x1x256xf32> to vector<1x256xf32>
    %21 = vector.broadcast %20 : vector<1x256xf32> to vector<4x256xf32>
    %22 = arith.mulf %18, %21 : vector<4x256xf32>
    %c255_i32 = arith.constant 255 : i32
    %23 = tpu.dynamic_rotate %1 by %c255_i32 dim 1 : vector<4x256xf32>, i32 -> vector<4x256xf32>
    %c5 = arith.constant 5 : index
    %c0_13 = arith.constant 0 : index
    %c0_14 = arith.constant 0 : index
    %24 = vector.load %arg3[%c5, %c0_13, %c0_14] : memref<9x1x256xf32, #tpu.memory_space<vmem>>, vector<1x1x256xf32>
    %25 = vector.shape_cast %24 : vector<1x1x256xf32> to vector<1x256xf32>
    %26 = vector.broadcast %25 : vector<1x256xf32> to vector<4x256xf32>
    %27 = arith.mulf %23, %26 : vector<4x256xf32>
    %c241_i32 = arith.constant 241 : i32
    %28 = tpu.dynamic_rotate %1 by %c241_i32 dim 1 : vector<4x256xf32>, i32 -> vector<4x256xf32>
    %c6 = arith.constant 6 : index
    %c0_15 = arith.constant 0 : index
    %c0_16 = arith.constant 0 : index
    %29 = vector.load %arg3[%c6, %c0_15, %c0_16] : memref<9x1x256xf32, #tpu.memory_space<vmem>>, vector<1x1x256xf32>
    %30 = vector.shape_cast %29 : vector<1x1x256xf32> to vector<1x256xf32>
    %31 = vector.broadcast %30 : vector<1x256xf32> to vector<4x256xf32>
    %32 = arith.mulf %28, %31 : vector<4x256xf32>
    %c240_i32 = arith.constant 240 : i32
    %33 = tpu.dynamic_rotate %1 by %c240_i32 dim 1 : vector<4x256xf32>, i32 -> vector<4x256xf32>
    %c7 = arith.constant 7 : index
    %c0_17 = arith.constant 0 : index
    %c0_18 = arith.constant 0 : index
    %34 = vector.load %arg3[%c7, %c0_17, %c0_18] : memref<9x1x256xf32, #tpu.memory_space<vmem>>, vector<1x1x256xf32>
    %35 = vector.shape_cast %34 : vector<1x1x256xf32> to vector<1x256xf32>
    %36 = vector.broadcast %35 : vector<1x256xf32> to vector<4x256xf32>
    %37 = arith.mulf %33, %36 : vector<4x256xf32>
    %c239_i32 = arith.constant 239 : i32
    %38 = tpu.dynamic_rotate %1 by %c239_i32 dim 1 : vector<4x256xf32>, i32 -> vector<4x256xf32>
    %c8 = arith.constant 8 : index
    %c0_19 = arith.constant 0 : index
    %c0_20 = arith.constant 0 : index
    %39 = vector.load %arg3[%c8, %c0_19, %c0_20] : memref<9x1x256xf32, #tpu.memory_space<vmem>>, vector<1x1x256xf32>
    %40 = vector.shape_cast %39 : vector<1x1x256xf32> to vector<1x256xf32>
    %41 = vector.broadcast %40 : vector<1x256xf32> to vector<4x256xf32>
    %42 = arith.mulf %38, %41 : vector<4x256xf32>
    %cst = arith.constant 0.000000e+00 : f32
    %43 = vector.broadcast %cst : f32 to vector<4x256xf32>
    %c0_21 = arith.constant 0 : index
    %c0_22 = arith.constant 0 : index
    %c0_23 = arith.constant 0 : index
    %c0_24 = arith.constant 0 : index
    %44 = vector.load %arg2[%c0_21, %c0_22, %c0_23, %c0_24] : memref<4x4x4x4xf32, #tpu.memory_space<vmem>>, vector<1x1x4x4xf32>
    %45 = vector.shape_cast %44 : vector<1x1x4x4xf32> to vector<4x4xf32>
    %cst_25 = arith.constant dense<0.000000e+00> : vector<4x256xf32>
    %46 = tpu.matmul %45, %7, %cst_25 {dimension_numbers = #tpu.dot_dimension_numbers<[1], [0], [0], [1], [0, 0, 1, 1], [], []>} : vector<4x4xf32>, vector<4x256xf32>, vector<4x256xf32> -> vector<4x256xf32>
    %47 = arith.addf %43, %46 : vector<4x256xf32>
    %c0_26 = arith.constant 0 : index
    %c1_27 = arith.constant 1 : index
    %c0_28 = arith.constant 0 : index
    %c0_29 = arith.constant 0 : index
    %48 = vector.load %arg2[%c0_26, %c1_27, %c0_28, %c0_29] : memref<4x4x4x4xf32, #tpu.memory_space<vmem>>, vector<1x1x4x4xf32>
    %49 = vector.shape_cast %48 : vector<1x1x4x4xf32> to vector<4x4xf32>
    %cst_30 = arith.constant dense<0.000000e+00> : vector<4x256xf32>
    %50 = tpu.matmul %49, %12, %cst_30 {dimension_numbers = #tpu.dot_dimension_numbers<[1], [0], [0], [1], [0, 0, 1, 1], [], []>} : vector<4x4xf32>, vector<4x256xf32>, vector<4x256xf32> -> vector<4x256xf32>
    %51 = arith.addf %47, %50 : vector<4x256xf32>
    %c0_31 = arith.constant 0 : index
    %c2_32 = arith.constant 2 : index
    %c0_33 = arith.constant 0 : index
    %c0_34 = arith.constant 0 : index
    %52 = vector.load %arg2[%c0_31, %c2_32, %c0_33, %c0_34] : memref<4x4x4x4xf32, #tpu.memory_space<vmem>>, vector<1x1x4x4xf32>
    %53 = vector.shape_cast %52 : vector<1x1x4x4xf32> to vector<4x4xf32>
    %cst_35 = arith.constant dense<0.000000e+00> : vector<4x256xf32>
    %54 = tpu.matmul %53, %22, %cst_35 {dimension_numbers = #tpu.dot_dimension_numbers<[1], [0], [0], [1], [0, 0, 1, 1], [], []>} : vector<4x4xf32>, vector<4x256xf32>, vector<4x256xf32> -> vector<4x256xf32>
    %55 = arith.addf %51, %54 : vector<4x256xf32>
    %c0_36 = arith.constant 0 : index
    %c3_37 = arith.constant 3 : index
    %c0_38 = arith.constant 0 : index
    %c0_39 = arith.constant 0 : index
    %56 = vector.load %arg2[%c0_36, %c3_37, %c0_38, %c0_39] : memref<4x4x4x4xf32, #tpu.memory_space<vmem>>, vector<1x1x4x4xf32>
    %57 = vector.shape_cast %56 : vector<1x1x4x4xf32> to vector<4x4xf32>
    %cst_40 = arith.constant dense<0.000000e+00> : vector<4x256xf32>
    %58 = tpu.matmul %57, %1, %cst_40 {dimension_numbers = #tpu.dot_dimension_numbers<[1], [0], [0], [1], [0, 0, 1, 1], [], []>} : vector<4x4xf32>, vector<4x256xf32>, vector<4x256xf32> -> vector<4x256xf32>
    %59 = arith.addf %55, %58 : vector<4x256xf32>
    %60 = vector.broadcast %2 : vector<4x1xf32> to vector<4x256xf32>
    %61 = arith.addf %59, %60 : vector<4x256xf32>
    %c0_41 = arith.constant 0 : index
    %c0_42 = arith.constant 0 : index
    %c0_43 = arith.constant 0 : index
    %c0_44 = arith.constant 0 : index
    %62 = vector.load %arg5[%c0_41, %c0_42, %c0_43, %c0_44] : memref<1x4x4x256xf32, #tpu.memory_space<vmem>>, vector<1x1x4x256xf32>
    %63 = vector.shape_cast %62 : vector<1x1x4x256xf32> to vector<4x256xf32>
    %64 = vector.shape_cast %61 : vector<4x256xf32> to vector<1x1x4x256xf32>
    tpu.vector_store %arg5[%c0_41, %c0_42, %c0_43, %c0_44], %64 {strides = array<i32>} : memref<1x4x4x256xf32, #tpu.memory_space<vmem>>, vector<1x1x4x256xf32>,
    %cst_45 = arith.constant 0.000000e+00 : f32
    %65 = vector.broadcast %cst_45 : f32 to vector<4x256xf32>
    %c1_46 = arith.constant 1 : index
    %c0_47 = arith.constant 0 : index
    %c0_48 = arith.constant 0 : index
    %c0_49 = arith.constant 0 : index
    %66 = vector.load %arg2[%c1_46, %c0_47, %c0_48, %c0_49] : memref<4x4x4x4xf32, #tpu.memory_space<vmem>>, vector<1x1x4x4xf32>
    %67 = vector.shape_cast %66 : vector<1x1x4x4xf32> to vector<4x4xf32>
    %cst_50 = arith.constant dense<0.000000e+00> : vector<4x256xf32>
    %68 = tpu.matmul %67, %12, %cst_50 {dimension_numbers = #tpu.dot_dimension_numbers<[1], [0], [0], [1], [0, 0, 1, 1], [], []>} : vector<4x4xf32>, vector<4x256xf32>, vector<4x256xf32> -> vector<4x256xf32>
    %69 = arith.addf %65, %68 : vector<4x256xf32>
    %c1_51 = arith.constant 1 : index
    %c1_52 = arith.constant 1 : index
    %c0_53 = arith.constant 0 : index
    %c0_54 = arith.constant 0 : index
    %70 = vector.load %arg2[%c1_51, %c1_52, %c0_53, %c0_54] : memref<4x4x4x4xf32, #tpu.memory_space<vmem>>, vector<1x1x4x4xf32>
    %71 = vector.shape_cast %70 : vector<1x1x4x4xf32> to vector<4x4xf32>
    %cst_55 = arith.constant dense<0.000000e+00> : vector<4x256xf32>
    %72 = tpu.matmul %71, %17, %cst_55 {dimension_numbers = #tpu.dot_dimension_numbers<[1], [0], [0], [1], [0, 0, 1, 1], [], []>} : vector<4x4xf32>, vector<4x256xf32>, vector<4x256xf32> -> vector<4x256xf32>
    %73 = arith.addf %69, %72 : vector<4x256xf32>
    %c1_56 = arith.constant 1 : index
    %c2_57 = arith.constant 2 : index
    %c0_58 = arith.constant 0 : index
    %c0_59 = arith.constant 0 : index
    %74 = vector.load %arg2[%c1_56, %c2_57, %c0_58, %c0_59] : memref<4x4x4x4xf32, #tpu.memory_space<vmem>>, vector<1x1x4x4xf32>
    %75 = vector.shape_cast %74 : vector<1x1x4x4xf32> to vector<4x4xf32>
    %cst_60 = arith.constant dense<0.000000e+00> : vector<4x256xf32>
    %76 = tpu.matmul %75, %1, %cst_60 {dimension_numbers = #tpu.dot_dimension_numbers<[1], [0], [0], [1], [0, 0, 1, 1], [], []>} : vector<4x4xf32>, vector<4x256xf32>, vector<4x256xf32> -> vector<4x256xf32>
    %77 = arith.addf %73, %76 : vector<4x256xf32>
    %c1_61 = arith.constant 1 : index
    %c3_62 = arith.constant 3 : index
    %c0_63 = arith.constant 0 : index
    %c0_64 = arith.constant 0 : index
    %78 = vector.load %arg2[%c1_61, %c3_62, %c0_63, %c0_64] : memref<4x4x4x4xf32, #tpu.memory_space<vmem>>, vector<1x1x4x4xf32>
    %79 = vector.shape_cast %78 : vector<1x1x4x4xf32> to vector<4x4xf32>
    %cst_65 = arith.constant dense<0.000000e+00> : vector<4x256xf32>
    %80 = tpu.matmul %79, %27, %cst_65 {dimension_numbers = #tpu.dot_dimension_numbers<[1], [0], [0], [1], [0, 0, 1, 1], [], []>} : vector<4x4xf32>, vector<4x256xf32>, vector<4x256xf32> -> vector<4x256xf32>
    %81 = arith.addf %77, %80 : vector<4x256xf32>
    %82 = vector.broadcast %2 : vector<4x1xf32> to vector<4x256xf32>
    %83 = arith.addf %81, %82 : vector<4x256xf32>
    %c0_66 = arith.constant 0 : index
    %c1_67 = arith.constant 1 : index
    %c0_68 = arith.constant 0 : index
    %c0_69 = arith.constant 0 : index
    %84 = vector.load %arg5[%c0_66, %c1_67, %c0_68, %c0_69] : memref<1x4x4x256xf32, #tpu.memory_space<vmem>>, vector<1x1x4x256xf32>
    %85 = vector.shape_cast %84 : vector<1x1x4x256xf32> to vector<4x256xf32>
    %86 = vector.shape_cast %83 : vector<4x256xf32> to vector<1x1x4x256xf32>
    tpu.vector_store %arg5[%c0_66, %c1_67, %c0_68, %c0_69], %86 {strides = array<i32>} : memref<1x4x4x256xf32, #tpu.memory_space<vmem>>, vector<1x1x4x256xf32>,
    %cst_70 = arith.constant 0.000000e+00 : f32
    %87 = vector.broadcast %cst_70 : f32 to vector<4x256xf32>
    %c2_71 = arith.constant 2 : index
    %c0_72 = arith.constant 0 : index
    %c0_73 = arith.constant 0 : index
    %c0_74 = arith.constant 0 : index
    %88 = vector.load %arg2[%c2_71, %c0_72, %c0_73, %c0_74] : memref<4x4x4x4xf32, #tpu.memory_space<vmem>>, vector<1x1x4x4xf32>
    %89 = vector.shape_cast %88 : vector<1x1x4x4xf32> to vector<4x4xf32>
    %cst_75 = arith.constant dense<0.000000e+00> : vector<4x256xf32>
    %90 = tpu.matmul %89, %22, %cst_75 {dimension_numbers = #tpu.dot_dimension_numbers<[1], [0], [0], [1], [0, 0, 1, 1], [], []>} : vector<4x4xf32>, vector<4x256xf32>, vector<4x256xf32> -> vector<4x256xf32>
    %91 = arith.addf %87, %90 : vector<4x256xf32>
    %c2_76 = arith.constant 2 : index
    %c1_77 = arith.constant 1 : index
    %c0_78 = arith.constant 0 : index
    %c0_79 = arith.constant 0 : index
    %92 = vector.load %arg2[%c2_76, %c1_77, %c0_78, %c0_79] : memref<4x4x4x4xf32, #tpu.memory_space<vmem>>, vector<1x1x4x4xf32>
    %93 = vector.shape_cast %92 : vector<1x1x4x4xf32> to vector<4x4xf32>
    %cst_80 = arith.constant dense<0.000000e+00> : vector<4x256xf32>
    %94 = tpu.matmul %93, %1, %cst_80 {dimension_numbers = #tpu.dot_dimension_numbers<[1], [0], [0], [1], [0, 0, 1, 1], [], []>} : vector<4x4xf32>, vector<4x256xf32>, vector<4x256xf32> -> vector<4x256xf32>
    %95 = arith.addf %91, %94 : vector<4x256xf32>
    %c2_81 = arith.constant 2 : index
    %c2_82 = arith.constant 2 : index
    %c0_83 = arith.constant 0 : index
    %c0_84 = arith.constant 0 : index
    %96 = vector.load %arg2[%c2_81, %c2_82, %c0_83, %c0_84] : memref<4x4x4x4xf32, #tpu.memory_space<vmem>>, vector<1x1x4x4xf32>
    %97 = vector.shape_cast %96 : vector<1x1x4x4xf32> to vector<4x4xf32>
    %cst_85 = arith.constant dense<0.000000e+00> : vector<4x256xf32>
    %98 = tpu.matmul %97, %32, %cst_85 {dimension_numbers = #tpu.dot_dimension_numbers<[1], [0], [0], [1], [0, 0, 1, 1], [], []>} : vector<4x4xf32>, vector<4x256xf32>, vector<4x256xf32> -> vector<4x256xf32>
    %99 = arith.addf %95, %98 : vector<4x256xf32>
    %c2_86 = arith.constant 2 : index
    %c3_87 = arith.constant 3 : index
    %c0_88 = arith.constant 0 : index
    %c0_89 = arith.constant 0 : index
    %100 = vector.load %arg2[%c2_86, %c3_87, %c0_88, %c0_89] : memref<4x4x4x4xf32, #tpu.memory_space<vmem>>, vector<1x1x4x4xf32>
    %101 = vector.shape_cast %100 : vector<1x1x4x4xf32> to vector<4x4xf32>
    %cst_90 = arith.constant dense<0.000000e+00> : vector<4x256xf32>
    %102 = tpu.matmul %101, %37, %cst_90 {dimension_numbers = #tpu.dot_dimension_numbers<[1], [0], [0], [1], [0, 0, 1, 1], [], []>} : vector<4x4xf32>, vector<4x256xf32>, vector<4x256xf32> -> vector<4x256xf32>
    %103 = arith.addf %99, %102 : vector<4x256xf32>
    %104 = vector.broadcast %2 : vector<4x1xf32> to vector<4x256xf32>
    %105 = arith.addf %103, %104 : vector<4x256xf32>
    %c0_91 = arith.constant 0 : index
    %c2_92 = arith.constant 2 : index
    %c0_93 = arith.constant 0 : index
    %c0_94 = arith.constant 0 : index
    %106 = vector.load %arg5[%c0_91, %c2_92, %c0_93, %c0_94] : memref<1x4x4x256xf32, #tpu.memory_space<vmem>>, vector<1x1x4x256xf32>
    %107 = vector.shape_cast %106 : vector<1x1x4x256xf32> to vector<4x256xf32>
    %108 = vector.shape_cast %105 : vector<4x256xf32> to vector<1x1x4x256xf32>
    tpu.vector_store %arg5[%c0_91, %c2_92, %c0_93, %c0_94], %108 {strides = array<i32>} : memref<1x4x4x256xf32, #tpu.memory_space<vmem>>, vector<1x1x4x256xf32>,
    %cst_95 = arith.constant 0.000000e+00 : f32
    %109 = vector.broadcast %cst_95 : f32 to vector<4x256xf32>
    %c3_96 = arith.constant 3 : index
    %c0_97 = arith.constant 0 : index
    %c0_98 = arith.constant 0 : index
    %c0_99 = arith.constant 0 : index
    %110 = vector.load %arg2[%c3_96, %c0_97, %c0_98, %c0_99] : memref<4x4x4x4xf32, #tpu.memory_space<vmem>>, vector<1x1x4x4xf32>
    %111 = vector.shape_cast %110 : vector<1x1x4x4xf32> to vector<4x4xf32>
    %cst_100 = arith.constant dense<0.000000e+00> : vector<4x256xf32>
    %112 = tpu.matmul %111, %1, %cst_100 {dimension_numbers = #tpu.dot_dimension_numbers<[1], [0], [0], [1], [0, 0, 1, 1], [], []>} : vector<4x4xf32>, vector<4x256xf32>, vector<4x256xf32> -> vector<4x256xf32>
    %113 = arith.addf %109, %112 : vector<4x256xf32>
    %c3_101 = arith.constant 3 : index
    %c1_102 = arith.constant 1 : index
    %c0_103 = arith.constant 0 : index
    %c0_104 = arith.constant 0 : index
    %114 = vector.load %arg2[%c3_101, %c1_102, %c0_103, %c0_104] : memref<4x4x4x4xf32, #tpu.memory_space<vmem>>, vector<1x1x4x4xf32>
    %115 = vector.shape_cast %114 : vector<1x1x4x4xf32> to vector<4x4xf32>
    %cst_105 = arith.constant dense<0.000000e+00> : vector<4x256xf32>
    %116 = tpu.matmul %115, %27, %cst_105 {dimension_numbers = #tpu.dot_dimension_numbers<[1], [0], [0], [1], [0, 0, 1, 1], [], []>} : vector<4x4xf32>, vector<4x256xf32>, vector<4x256xf32> -> vector<4x256xf32>
    %117 = arith.addf %113, %116 : vector<4x256xf32>
    %c3_106 = arith.constant 3 : index
    %c2_107 = arith.constant 2 : index
    %c0_108 = arith.constant 0 : index
    %c0_109 = arith.constant 0 : index
    %118 = vector.load %arg2[%c3_106, %c2_107, %c0_108, %c0_109] : memref<4x4x4x4xf32, #tpu.memory_space<vmem>>, vector<1x1x4x4xf32>
    %119 = vector.shape_cast %118 : vector<1x1x4x4xf32> to vector<4x4xf32>
    %cst_110 = arith.constant dense<0.000000e+00> : vector<4x256xf32>
    %120 = tpu.matmul %119, %37, %cst_110 {dimension_numbers = #tpu.dot_dimension_numbers<[1], [0], [0], [1], [0, 0, 1, 1], [], []>} : vector<4x4xf32>, vector<4x256xf32>, vector<4x256xf32> -> vector<4x256xf32>
    %121 = arith.addf %117, %120 : vector<4x256xf32>
    %c3_111 = arith.constant 3 : index
    %c3_112 = arith.constant 3 : index
    %c0_113 = arith.constant 0 : index
    %c0_114 = arith.constant 0 : index
    %122 = vector.load %arg2[%c3_111, %c3_112, %c0_113, %c0_114] : memref<4x4x4x4xf32, #tpu.memory_space<vmem>>, vector<1x1x4x4xf32>
    %123 = vector.shape_cast %122 : vector<1x1x4x4xf32> to vector<4x4xf32>
    %cst_115 = arith.constant dense<0.000000e+00> : vector<4x256xf32>
    %124 = tpu.matmul %123, %42, %cst_115 {dimension_numbers = #tpu.dot_dimension_numbers<[1], [0], [0], [1], [0, 0, 1, 1], [], []>} : vector<4x4xf32>, vector<4x256xf32>, vector<4x256xf32> -> vector<4x256xf32>
    %125 = arith.addf %121, %124 : vector<4x256xf32>
    %126 = vector.broadcast %2 : vector<4x1xf32> to vector<4x256xf32>
    %127 = arith.addf %125, %126 : vector<4x256xf32>
    %c0_116 = arith.constant 0 : index
    %c3_117 = arith.constant 3 : index
    %c0_118 = arith.constant 0 : index
    %c0_119 = arith.constant 0 : index
    %128 = vector.load %arg5[%c0_116, %c3_117, %c0_118, %c0_119] : memref<1x4x4x256xf32, #tpu.memory_space<vmem>>, vector<1x1x4x256xf32>
    %129 = vector.shape_cast %128 : vector<1x1x4x256xf32> to vector<4x256xf32>
    %130 = vector.shape_cast %127 : vector<4x256xf32> to vector<1x1x4x256xf32>
    tpu.vector_store %arg5[%c0_116, %c3_117, %c0_118, %c0_119], %130 {strides = array<i32>} : memref<1x4x4x256xf32, #tpu.memory_space<vmem>>, vector<1x1x4x256xf32>,
    return
  }
  func.func @transform_0(%arg0: i32) -> (i32, i32, i32) {
    %c0_i32 = arith.constant 0 : i32
    %c0_i32_0 = arith.constant 0 : i32
    %c0_i32_1 = arith.constant 0 : i32
    return %arg0, %c0_i32, %c0_i32_0 : i32, i32, i32
  }
  func.func @transform_1(%arg0: i32) -> (i32, i32, i32, i32) {
    %c0_i32 = arith.constant 0 : i32
    %c0_i32_0 = arith.constant 0 : i32
    %c0_i32_1 = arith.constant 0 : i32
    %c0_i32_2 = arith.constant 0 : i32
    %c0_i32_3 = arith.constant 0 : i32
    return %c0_i32, %c0_i32_0, %c0_i32_1, %c0_i32_2 : i32, i32, i32, i32
  }
  func.func @transform_2(%arg0: i32) -> (i32, i32, i32) {
    %c0_i32 = arith.constant 0 : i32
    %c0_i32_0 = arith.constant 0 : i32
    %c0_i32_1 = arith.constant 0 : i32
    %c0_i32_2 = arith.constant 0 : i32
    return %c0_i32, %c0_i32_0, %c0_i32_1 : i32, i32, i32
  }
  func.func @transform_3(%arg0: i32) -> (i32, i32) {
    %c0_i32 = arith.constant 0 : i32
    %c0_i32_0 = arith.constant 0 : i32
    %c0_i32_1 = arith.constant 0 : i32
    return %c0_i32, %c0_i32_0 : i32, i32
  }
  func.func @transform_4(%arg0: i32) -> (i32, i32, i32, i32) {
    %c0_i32 = arith.constant 0 : i32
    %c0_i32_0 = arith.constant 0 : i32
    %c0_i32_1 = arith.constant 0 : i32
    %c0_i32_2 = arith.constant 0 : i32
    return %arg0, %c0_i32, %c0_i32_0, %c0_i32_1 : i32, i32, i32, i32
  }
}

</mosaic_0001>

<llo_original>
// kernel: tpu_custom_call.1
$region0: #{tpu_custom_call.1}
  #allocation0 [shape = 'u32[]', space=smem, size = 0x4, offset = 0x4, fixed_abs, tag = 'smem constant byte address 0x4 - core index']
  #allocation1 [shape = 'u32[144,128]{1,0:T(1,128)}', space=vmem, size = 0x12000, scoped, tag = 'internal scratch']
  %s0 = inlined_call_operand.hbm [shape: f32[2,4,256], index: 0, kind: input, shape index: {}]
  %s1 = inlined_call_operand.hbm [shape: f32[4,4,4,4], index: 1, kind: input, shape index: {}]
  %s2 = inlined_call_operand.hbm [shape: f32[9,1,256], index: 2, kind: input, shape index: {}]
  %s3 = inlined_call_operand.vmem [shape: f32[4,1], index: 3, kind: input, shape index: {}]
  %s4 = inlined_call_operand.hbm [shape: f32[2,4,4,256], index: 4, kind: output, shape index: {}]
  %s5 = sld [smem:[#allocation0]]
  $region61: #{tpu_custom_call.1} parent=0
    _
  %s7 = ssub.s32 1, %s5
  %s8 = scalar_select 0, %s7, %s5
  $region1: #{tpu_custom_call.1} parent=0
    #allocation2 [shape = 'u8[8192]{0}', space=vmem, size = 0x2000, scoped, tag = 'input window, operand 0']
    #allocation3 [shape = 's32[2]{0}', space=sflag, size = 0x8, scoped, tag = 'scoped memory for tpu_custom_call.1']
    #allocation4 [shape = 's32[2]{0}', space=sflag, size = 0x8, scoped, tag = 'scoped memory for tpu_custom_call.1']
    #allocation5 [shape = 'u8[32768]{0}', space=vmem, size = 0x8000, scoped, tag = 'input window, operand 1, single buffered']
    #allocation6 [shape = 's32[1]{0}', space=sflag, size = 0x4, scoped, tag = 'scoped memory for tpu_custom_call.1']
    #allocation7 [shape = 'u8[9216]{0}', space=vmem, size = 0x2400, scoped, tag = 'input window, operand 2, single buffered']
    #allocation8 [shape = 'u8[32768]{0}', space=vmem, size = 0x8000, scoped, tag = 'output window, operand 0']
    %9 = vsyncpa [#allocation3], 0
    %s10 = scalar_lea.sflag [#allocation3], 1
    %11 = vsyncpa %s10, 0
    %12 = vsyncpa [#allocation6], 0
    %13 = vsyncpa [#allocation4], 0
    %s14 = scalar_lea.sflag [#allocation4], 1
    %15 = vsyncpa %s14, 0
    loop: start=0, step=1, limit=4
    $region2: #{tpu_custom_call.1} parent=1 // loop_pre_header
      _
    $region3: #{tpu_custom_call.1} parent=1 // loop_header
      %s17 = sphi 0, %s21
      %p18 = scmp.ge.s32.totalorder %s17, 4
      %s27 = sphi 0, %s29
      %s30 = sphi 0, %s27
      %s31 = sphi 0, %s30
      %s47 = sphi 0, %s31
      %s51 = sphi 0, %s51
      %s53 = sphi 0, %s51
      %s54 = sphi 0, %s53
      %s68 = sphi 0, %s54
      %s72 = sphi 0, %s72
      %s74 = sphi 0, %s72
      %s75 = sphi 0, %s74
      %s89 = sphi 0, %s75
      %s93 = sphi 0, %s93
      %s95 = sphi 0, %s93
      %s96 = sphi 0, %s95
      %s110 = sphi 0, %s96
      %s116 = sphi 0, %s118
      %s119 = sphi 0, %s116
      %s120 = sphi 0, %s119
      %s136 = sphi 0, %s120
    $region4: #{tpu_custom_call.1} parent=1 // loop_header_branch
      %20 = sbr.rel (%p18) target = $region8
    $region5: #{tpu_custom_call.1} parent=1 // loop_body
      %s22 = ssub.s32 %s17, 1
      %s23 = ssub.s32 %s17, 2
      %s24 = sadd.s32 %s17, 1
      %s25 = ssub.s32 %s17, %s24
      %p26 = scmp.eq.s32.totalorder %s25, 0
      %s28 = sadd.s32 %s27, 1
      %s29 = scalar_select %p26, %s27, %s28
      %p32 = pneg %p26
      %p33 = scmp.eq.s32.totalorder %s17, 1
      %p34 = por %p32, %p33
      %p35 = scmp.ne.s32.totalorder %s27, %s30
      %p36 = scmp.eq.s32.totalorder %s17, 0
      %p37 = por %p35, %p36
      %p38 = scmp.ne.s32.totalorder %s27, %s30
      %p39 = scmp.eq.s32.totalorder %s22, 1
      %p40 = por %p38, %p39
      %p41 = scmp.ne.s32.totalorder %s30, %s31
      %p42 = scmp.eq.s32.totalorder %s22, 0
      %p43 = por %p41, %p42
      %p44 = scmp.ne.s32.totalorder %s30, %s31
      %p45 = scmp.eq.s32.totalorder %s23, 1
      %p46 = por %p44, %p45
      %p48 = scmp.ne.s32.totalorder %s31, %s47
      %p49 = scmp.eq.s32.totalorder %s23, 0
      %p50 = por %p48, %p49
      %s52 = sadd.s32 %s51, 1
      %p55 = scmp.eq.s32.totalorder %s17, 1
      %p56 = scmp.ne.s32.totalorder %s51, %s53
      %p57 = scmp.eq.s32.totalorder %s17, 0
      %p58 = por %p56, %p57
      %p59 = scmp.ne.s32.totalorder %s51, %s53
      %p60 = scmp.eq.s32.totalorder %s22, 1
      %p61 = por %p59, %p60
      %p62 = scmp.ne.s32.totalorder %s53, %s54
      %p63 = scmp.eq.s32.totalorder %s22, 0
      %p64 = por %p62, %p63
      %p65 = scmp.ne.s32.totalorder %s53, %s54
      %p66 = scmp.eq.s32.totalorder %s23, 1
      %p67 = por %p65, %p66
      %p69 = scmp.ne.s32.totalorder %s54, %s68
      %p70 = scmp.eq.s32.totalorder %s23, 0
      %p71 = por %p69, %p70
      %s73 = sadd.s32 %s72, 1
      %p76 = scmp.eq.s32.totalorder %s17, 1
      %p77 = scmp.ne.s32.totalorder %s72, %s74
      %p78 = scmp.eq.s32.totalorder %s17, 0
      %p79 = por %p77, %p78
      %p80 = scmp.ne.s32.totalorder %s72, %s74
      %p81 = scmp.eq.s32.totalorder %s22, 1
      %p82 = por %p80, %p81
      %p83 = scmp.ne.s32.totalorder %s74, %s75
      %p84 = scmp.eq.s32.totalorder %s22, 0
      %p85 = por %p83, %p84
      %p86 = scmp.ne.s32.totalorder %s74, %s75
      %p87 = scmp.eq.s32.totalorder %s23, 1
      %p88 = por %p86, %p87
      %p90 = scmp.ne.s32.totalorder %s75, %s89
      %p91 = scmp.eq.s32.totalorder %s23, 0
      %p92 = por %p90, %p91
      %s94 = sadd.s32 %s93, 1
      %p97 = scmp.eq.s32.totalorder %s17, 1
      %p98 = scmp.ne.s32.totalorder %s93, %s95
      %p99 = scmp.eq.s32.totalorder %s17, 0
      %p100 = por %p98, %p99
      %p101 = scmp.ne.s32.totalorder %s93, %s95
      %p102 = scmp.eq.s32.totalorder %s22, 1
      %p103 = por %p101, %p102
      %p104 = scmp.ne.s32.totalorder %s95, %s96
      %p105 = scmp.eq.s32.totalorder %s22, 0
      %p106 = por %p104, %p105
      %p107 = scmp.ne.s32.totalorder %s95, %s96
      %p108 = scmp.eq.s32.totalorder %s23, 1
      %p109 = por %p107, %p108
      %p111 = scmp.ne.s32.totalorder %s96, %s110
      %p112 = scmp.eq.s32.totalorder %s23, 0
      %p113 = por %p111, %p112
      %s114 = ssub.s32 %s17, %s24
      %p115 = scmp.eq.s32.totalorder %s114, 0
      %s117 = sadd.s32 %s116, 1
      %s118 = scalar_select %p115, %s116, %s117
      %p121 = pneg %p115
      %p122 = scmp.eq.s32.totalorder %s17, 1
      %p123 = por %p121, %p122
      %p124 = scmp.ne.s32.totalorder %s116, %s119
      %p125 = scmp.eq.s32.totalorder %s17, 0
      %p126 = por %p124, %p125
      %p127 = scmp.ne.s32.totalorder %s116, %s119
      %p128 = scmp.eq.s32.totalorder %s22, 1
      %p129 = por %p127, %p128
      %p130 = scmp.ne.s32.totalorder %s119, %s120
      %p131 = scmp.eq.s32.totalorder %s22, 0
      %p132 = por %p130, %p131
      %p133 = scmp.ne.s32.totalorder %s119, %s120
      %p134 = scmp.eq.s32.totalorder %s23, 1
      %p135 = por %p133, %p134
      %p137 = scmp.ne.s32.totalorder %s120, %s136
      %p138 = scmp.eq.s32.totalorder %s23, 0
      %p139 = por %p137, %p138
      %p140 = scmp.le.s32.totalorder 1, %s17
      %p141 = scmp.lt.s32.totalorder %s17, 3
      %p142 = pnand %p140, %p141
      %p143 = pneg %p142
      // Predicated region
      $region9: #{tpu_custom_call.1} parent=5 // pred_check
        _
      $region10: #{tpu_custom_call.1} parent=5 // pred_check_branch
        %145 = sbr.rel (%p142) target = $region12
      $region11: #{tpu_custom_call.1} parent=5 // pred_region
        %s146 = ssub.s32 %s17, 1
        // Predicated region
        $region13: #{tpu_custom_call.1} parent=11 // pred_check
          %p147 = pneg %p64
        $region14: #{tpu_custom_call.1} parent=11 // pred_check_branch
          %149 = sbr.rel (%p147) target = $region16
        $region15: #{tpu_custom_call.1} parent=11 // pred_region
          %s151 = ssub.s32 1024, 1024
          %152 = vsyncadd [#allocation6], %s151
          %s153 = sshll.u32 [#allocation5], 4
          %s154 = int_to_ptr.vmem [resolvable:$true] %s153
          %159 = dma.hbm_to_vmem [thread:$0]  %s1, 1024, %s154, [#allocation6], 64, 64, 4
        $region16: #{tpu_custom_call.1} parent=11 // pred_fallthru
          _
        // Predicated region
        $region17: #{tpu_custom_call.1} parent=11 // pred_check
          %p160 = pneg %p85
        $region18: #{tpu_custom_call.1} parent=11 // pred_check_branch
          %162 = sbr.rel (%p160) target = $region20
        $region19: #{tpu_custom_call.1} parent=11 // pred_region
          %s164 = ssub.s32 288, 288
          %165 = vsyncadd [#allocation6], %s164
          %s166 = sshll.u32 [#allocation7], 4
          %s167 = int_to_ptr.vmem [resolvable:$true] %s166
          %172 = dma.hbm_to_vmem [thread:$0]  %s2, 288, %s167, [#allocation6], 32, 32, 2
        $region20: #{tpu_custom_call.1} parent=11 // pred_fallthru
          _
        // Predicated region
        $region21: #{tpu_custom_call.1} parent=11 // pred_check
          %p173 = pneg %p106
        $region22: #{tpu_custom_call.1} parent=11 // pred_check_branch
          %175 = sbr.rel (%p173) target = $region24
        $region23: #{tpu_custom_call.1} parent=11 // pred_region
          _
        $region24: #{tpu_custom_call.1} parent=11 // pred_fallthru
          _
      $region12: #{tpu_custom_call.1} parent=5 // pred_fallthru
        _
      %p176 = scmp.lt.s32.totalorder %s17, 2
      // Predicated region
      $region25: #{tpu_custom_call.1} parent=5 // pred_check
        %p177 = pneg %p176
      $region26: #{tpu_custom_call.1} parent=5 // pred_check_branch
        %179 = sbr.rel (%p177) target = $region28
      $region27: #{tpu_custom_call.1} parent=5 // pred_region
        // Predicated region
        $region29: #{tpu_custom_call.1} parent=27 // pred_check
          %p180 = pneg %p37
        $region30: #{tpu_custom_call.1} parent=27 // pred_check_branch
          %182 = sbr.rel (%p180) target = $region32
        $region31: #{tpu_custom_call.1} parent=27 // pred_region
          %s183 = sand.u32 %s27, 1
          %s184 = scalar_lea.sflag [#allocation3], %s183
          %s185 = sand.u32 %s27, 1
          %s186 = smul.addr %s185, 8
          %s187 = scalar_lea.vmem [#allocation2], %s186
          %s189 = ssub.s32 128, 128
          %190 = vsyncadd %s184, %s189
          %s191 = smul.addr %s17, 2
          %s192 = smul.addr %s191, 64
          %s193 = scalar_lea.hbm %s0, %s192
          %s195 = sshll.u32 %s187, 4
          %s196 = int_to_ptr.vmem [resolvable:$true] %s195
          %198 = dma.hbm_to_vmem [thread:$0]  %s193, 128, %s196, %s184
        $region32: #{tpu_custom_call.1} parent=27 // pred_fallthru
          _
      $region28: #{tpu_custom_call.1} parent=5 // pred_fallthru
        _
      %p199 = scmp.le.s32.totalorder 1, %s17
      %p200 = scmp.lt.s32.totalorder %s17, 3
      %p201 = pnand %p199, %p200
      %p202 = pneg %p201
      // Predicated region
      $region33: #{tpu_custom_call.1} parent=5 // pred_check
        _
      $region34: #{tpu_custom_call.1} parent=5 // pred_check_branch
        %204 = sbr.rel (%p201) target = $region36
      $region35: #{tpu_custom_call.1} parent=5 // pred_region
        %s205 = ssub.s32 %s17, 1
        %s206 = sand.u32 %s30, 1
        %s207 = scalar_lea.sflag [#allocation3], %s206
        %s208 = sand.u32 %s30, 1
        %s209 = smul.addr %s208, 8
        %s210 = scalar_lea.vmem [#allocation2], %s209
        // Predicated region
        $region37: #{tpu_custom_call.1} parent=35 // pred_check
          %p211 = pneg %p43
        $region38: #{tpu_custom_call.1} parent=35 // pred_check_branch
          %213 = sbr.rel (%p211) target = $region40
        $region39: #{tpu_custom_call.1} parent=35 // pred_region
          %214 = dma.done %s207, 128
        $region40: #{tpu_custom_call.1} parent=35 // pred_fallthru
          _
        // Predicated region
        $region41: #{tpu_custom_call.1} parent=35 // pred_check
          %p215 = pneg %p64
        $region42: #{tpu_custom_call.1} parent=35 // pred_check_branch
          %217 = sbr.rel (%p215) target = $region44
        $region43: #{tpu_custom_call.1} parent=35 // pred_region
          %218 = dma.done [#allocation6], 1024
        $region44: #{tpu_custom_call.1} parent=35 // pred_fallthru
          _
        // Predicated region
        $region45: #{tpu_custom_call.1} parent=35 // pred_check
          %p219 = pneg %p85
        $region46: #{tpu_custom_call.1} parent=35 // pred_check_branch
          %221 = sbr.rel (%p219) target = $region48
        $region47: #{tpu_custom_call.1} parent=35 // pred_region
          %222 = dma.done [#allocation6], 288
        $region48: #{tpu_custom_call.1} parent=35 // pred_fallthru
          _
        %s223 = sand.u32 %s30, 1
        %s224 = scalar_lea.sflag [#allocation3], %s223
        %s225 = sand.u32 %s30, 1
        %s226 = smul.addr %s225, 8
        %s227 = scalar_lea.vmem [#allocation2], %s226
        %p228 = pneg %p43
        %p229 = pneg %p40
        %p230 = pneg %p64
        %p231 = pneg %p61
        %p232 = pneg %p85
        %p233 = pneg %p82
        %p234 = pneg %p106
        %p235 = pneg %p103
        %p236 = pneg %p132
        %p237 = pneg %p129
        %s238 = sand.u32 %s119, 1
        %s239 = scalar_lea.sflag [#allocation4], %s238
        %s240 = sand.u32 %s119, 1
        %s241 = smul.addr %s240, 32
        %s242 = scalar_lea.vmem [#allocation8], %s241
        %v243 = vld [vmem:[%s210] sm:$0xff]
        %v244 = vld [vmem:[%s3] sm:$0xf]
        %v246 = vcombine.high %v243, %v243
        %248 = vrot.lane.b32.xlu0 %v243, 17
        %v249 = vpop.permute.xlu0 %248
        %250 = vrot.lane.b32.xlu0 %v246, 17
        %v251 = vpop.permute.xlu0 %250
        %v252 = vlaneseq
        %v253 = vand.u32 %v252, 127
        %vm254 = vcmp.lt.s32.totalorder %v253, 17
        %v255 = vsel %vm254, %v249, %v251
        %v256 = vsel %vm254, %v251, %v249
        %v257 = vld [vmem:[#allocation7] sm:$0x3]
        %v259 = vlaneseq
        %v260 = vshrl.u32 %v259, 7
        %v261 = vsub.s32 0, %v260
        %v262 = vrot.slane %v257, %v261
        %v263 = vlaneseq
        %v264 = vshrl.u32 %v263, 7
        %v265 = vsub.s32 1, %v264
        %v266 = vrot.slane %v257, %v265
        %v269 = vmul.f32 %v256, %v262
        %v270 = vmul.f32 %v255, %v266
        %271 = vrot.lane.b32.xlu0 %v243, 16
        %v272 = vpop.permute.xlu0 %271
        %273 = vrot.lane.b32.xlu0 %v246, 16
        %v274 = vpop.permute.xlu0 %273
        %vm275 = vcmp.lt.s32.totalorder %v253, 16
        %v276 = vsel %vm275, %v272, %v274
        %v277 = vsel %vm275, %v274, %v272
        %s278 = scalar_lea.vmem [#allocation7], 2
        %v279 = vld [vmem:[%s278] sm:$0x3]
        %v281 = vlaneseq
        %v282 = vshrl.u32 %v281, 7
        %v283 = vsub.s32 0, %v282
        %v284 = vrot.slane %v279, %v283
        %v285 = vlaneseq
        %v286 = vshrl.u32 %v285, 7
        %v287 = vsub.s32 1, %v286
        %v288 = vrot.slane %v279, %v287
        %v291 = vmul.f32 %v277, %v284
        %v292 = vmul.f32 %v276, %v288
        %293 = vrot.lane.b32.xlu0 %v243, 15
        %v294 = vpop.permute.xlu0 %293
        %295 = vrot.lane.b32.xlu0 %v246, 15
        %v296 = vpop.permute.xlu0 %295
        %vm297 = vcmp.lt.s32.totalorder %v253, 15
        %v298 = vsel %vm297, %v294, %v296
        %v299 = vsel %vm297, %v296, %v294
        %s300 = scalar_lea.vmem [#allocation7], 4
        %v301 = vld [vmem:[%s300] sm:$0x3]
        %v303 = vlaneseq
        %v304 = vshrl.u32 %v303, 7
        %v305 = vsub.s32 0, %v304
        %v306 = vrot.slane %v301, %v305
        %v307 = vlaneseq
        %v308 = vshrl.u32 %v307, 7
        %v309 = vsub.s32 1, %v308
        %v310 = vrot.slane %v301, %v309
        %v313 = vmul.f32 %v299, %v306
        %v314 = vmul.f32 %v298, %v310
        %315 = vrot.lane.b32.xlu0 %v243, 1
        %v316 = vpop.permute.xlu0 %315
        %317 = vrot.lane.b32.xlu0 %v246, 1
        %v318 = vpop.permute.xlu0 %317
        %vm319 = vcmp.lt.s32.totalorder %v253, 1
        %v320 = vsel %vm319, %v316, %v318
        %v321 = vsel %vm319, %v318, %v316
        %s322 = scalar_lea.vmem [#allocation7], 6
        %v323 = vld [vmem:[%s322] sm:$0x3]
        %v325 = vlaneseq
        %v326 = vshrl.u32 %v325, 7
        %v327 = vsub.s32 0, %v326
        %v328 = vrot.slane %v323, %v327
        %v329 = vlaneseq
        %v330 = vshrl.u32 %v329, 7
        %v331 = vsub.s32 1, %v330
        %v332 = vrot.slane %v323, %v331
        %v335 = vmul.f32 %v321, %v328
        %v336 = vmul.f32 %v320, %v332
        %337 = vrot.lane.b32.xlu0 %v243, 127
        %v338 = vpop.permute.xlu0 %337
        %339 = vrot.lane.b32.xlu0 %v246, 127
        %v340 = vpop.permute.xlu0 %339
        %vm341 = vcmp.lt.s32.totalorder %v253, 127
        %v342 = vsel %vm341, %v338, %v340
        %v343 = vsel %vm341, %v340, %v338
        %s344 = scalar_lea.vmem [#allocation7], 10
        %v345 = vld [vmem:[%s344] sm:$0x3]
        %v347 = vlaneseq
        %v348 = vshrl.u32 %v347, 7
        %v349 = vsub.s32 0, %v348
        %v350 = vrot.slane %v345, %v349
        %v351 = vlaneseq
        %v352 = vshrl.u32 %v351, 7
        %v353 = vsub.s32 1, %v352
        %v354 = vrot.slane %v345, %v353
        %v357 = vmul.f32 %v342, %v350
        %v358 = vmul.f32 %v343, %v354
        %359 = vrot.lane.b32.xlu0 %v243, 113
        %v360 = vpop.permute.xlu0 %359
        %361 = vrot.lane.b32.xlu0 %v246, 113
        %v362 = vpop.permute.xlu0 %361
        %vm363 = vcmp.lt.s32.totalorder %v253, 113
        %v364 = vsel %vm363, %v360, %v362
        %v365 = vsel %vm363, %v362, %v360
        %s366 = scalar_lea.vmem [#allocation7], 12
        %v367 = vld [vmem:[%s366] sm:$0x3]
        %v369 = vlaneseq
        %v370 = vshrl.u32 %v369, 7
        %v371 = vsub.s32 0, %v370
        %v372 = vrot.slane %v367, %v371
        %v373 = vlaneseq
        %v374 = vshrl.u32 %v373, 7
        %v375 = vsub.s32 1, %v374
        %v376 = vrot.slane %v367, %v375
        %v379 = vmul.f32 %v364, %v372
        %v380 = vmul.f32 %v365, %v376
        %381 = vrot.lane.b32.xlu0 %v243, 112
        %v382 = vpop.permute.xlu0 %381
        %383 = vrot.lane.b32.xlu0 %v246, 112
        %v384 = vpop.permute.xlu0 %383
        %vm385 = vcmp.lt.s32.totalorder %v253, 112
        %v386 = vsel %vm385, %v382, %v384
        %v387 = vsel %vm385, %v384, %v382
        %s388 = scalar_lea.vmem [#allocation7], 14
        %v389 = vld [vmem:[%s388] sm:$0x3]
        %v391 = vlaneseq
        %v392 = vshrl.u32 %v391, 7
        %v393 = vsub.s32 0, %v392
        %v394 = vrot.slane %v389, %v393
        %v395 = vlaneseq
        %v396 = vshrl.u32 %v395, 7
        %v397 = vsub.s32 1, %v396
        %v398 = vrot.slane %v389, %v397
        %v401 = vmul.f32 %v386, %v394
        %v402 = vmul.f32 %v387, %v398
        %403 = vrot.lane.b32.xlu0 %v243, 111
        %v404 = vpop.permute.xlu0 %403
        %405 = vrot.lane.b32.xlu0 %v246, 111
        %v406 = vpop.permute.xlu0 %405
        %vm407 = vcmp.lt.s32.totalorder %v253, 111
        %v408 = vsel %vm407, %v404, %v406
        %v409 = vsel %vm407, %v406, %v404
        %s410 = scalar_lea.vmem [#allocation7], 16
        %v411 = vld [vmem:[%s410] sm:$0x3]
        %v413 = vlaneseq
        %v414 = vshrl.u32 %v413, 7
        %v415 = vsub.s32 0, %v414
        %v416 = vrot.slane %v411, %v415
        %v417 = vlaneseq
        %v418 = vshrl.u32 %v417, 7
        %v419 = vsub.s32 1, %v418
        %v420 = vrot.slane %v411, %v419
        %v423 = vmul.f32 %v408, %v416
        %v424 = vmul.f32 %v409, %v420
        %v425 = vld [vmem:[#allocation5] sm:$0xf]
        %s426 = scalar_lea.vmem [#allocation5], 4
        %v427 = vld [vmem:[%s426] sm:$0xf]
        %vm428 = vcmask 31744
        %v430 = vsel %vm428, %v427, 0
        %vm432 = vcmask 1043456
        %v434 = vsel %vm432, %v291, 0
        %v437 = vsel %vm432, %v292, 0
        %439 = vmatprep.subr.mxu0 %v437
        %440 = vmatpush1.msra.mxu0 %v434
        %441 = vmatprep.subr.mxu0 0.0
        %442 = vmatpush1.msra.mxu0 0.0
        %443 = vmatprep.subr.mxu0 0.0
        %444 = vmatpush1.msra.mxu0 0.0
        %445 = vmatprep.subr.mxu0 0.0
        %446 = vmatpush1.msra.mxu0 0.0
        %447 = vmatprep.subr.mxu0 0.0
        %448 = vmatpush1.msra.mxu0 0.0
        %449 = vmatprep.subr.mxu0 0.0
        %450 = vmatpush1.msra.mxu0 0.0
        %451 = vmatprep.subr.mxu0 0.0
        %452 = vmatpush1.msra.mxu0 0.0
        %453 = vmatprep.subr.mxu0 0.0
        %454 = vmatpush1.msra.mxu0 0.0
        %455 = vmatprep.subr.mxu0 0.0
        %456 = vmatpush1.msra.mxu0 0.0
        %457 = vmatprep.subr.mxu0 0.0
        %458 = vmatpush1.msra.mxu0 0.0
        %459 = vmatprep.subr.mxu0 0.0
        %460 = vmatpush1.msra.mxu0 0.0
        %461 = vmatprep.subr.mxu0 0.0
        %462 = vmatpush1.msra.mxu0 0.0
        %463 = vmatprep.subr.mxu0 0.0
        %464 = vmatpush1.msra.mxu0 0.0
        %465 = vmatprep.subr.mxu0 0.0
        %466 = vmatpush1.msra.mxu0 0.0
        %467 = vmatprep.subr.mxu0 0.0
        %468 = vmatpush1.msra.mxu0 0.0
        %469 = vmatprep.subr.mxu0 0.0
        %470 = vmatpush1.msra.mxu0 0.0
        %471 = vmatprep.subr.mxu0 0.0
        %472 = vmatpush1.msra.mxu0 0.0
        %473 = vmatprep.subr.mxu0 0.0
        %474 = vmatpush1.msra.mxu0 0.0
        %475 = vmatprep.subr.mxu0 0.0
        %476 = vmatpush1.msra.mxu0 0.0
        %477 = vmatprep.subr.mxu0 0.0
        %478 = vmatpush1.msra.mxu0 0.0
        %479 = vmatprep.subr.mxu0 0.0
        %480 = vmatpush1.msra.mxu0 0.0
        %481 = vmatprep.subr.mxu0 0.0
        %482 = vmatpush1.msra.mxu0 0.0
        %483 = vmatprep.subr.mxu0 0.0
        %484 = vmatpush1.msra.mxu0 0.0
        %485 = vmatprep.subr.mxu0 0.0
        %486 = vmatpush1.msra.mxu0 0.0
        %487 = vmatprep.subr.mxu0 0.0
        %488 = vmatpush1.msra.mxu0 0.0
        %489 = vmatprep.subr.mxu0 0.0
        %490 = vmatpush1.msra.mxu0 0.0
        %491 = vmatprep.subr.mxu0 0.0
        %492 = vmatpush1.msra.mxu0 0.0
        %493 = vmatprep.subr.mxu0 0.0
        %494 = vmatpush1.msra.mxu0 0.0
        %495 = vmatprep.subr.mxu0 0.0
        %496 = vmatpush1.msra.mxu0 0.0
        %497 = vmatprep.subr.mxu0 0.0
        %498 = vmatpush1.msra.mxu0 0.0
        %499 = vmatprep.subr.mxu0 0.0
        %500 = vmatpush1.msra.mxu0 0.0
        %501 = vmatprep.subr.mxu0 0.0
        %502 = vmatpush1.msra.mxu0 0.0
        %503 = vmatprep.mubr.f32.mxu0 0.0
        %504 = vmatmul.mubr.f32.gmra.mrb[0].mxu0 %v430
        %v505 = vpop.f32.mrb[0].mxu0
        %v506 = vadd.f32 0.0, %v505
        %v507 = vpop.f32.mrb[0].mxu0
        %v508 = vadd.f32 0.0, %v507
        %509 = vdwg.mxu0
        %v511 = vsel %vm428, %v425, 0
        %v514 = vsel %vm432, %v269, 0
        %v517 = vsel %vm432, %v270, 0
        %519 = vmatprep.subr.mxu0 %v517
        %520 = vmatpush1.msra.mxu0 %v514
        %521 = vmatprep.subr.mxu0 0.0
        %522 = vmatpush1.msra.mxu0 0.0
        %523 = vmatprep.subr.mxu0 0.0
        %524 = vmatpush1.msra.mxu0 0.0
        %525 = vmatprep.subr.mxu0 0.0
        %526 = vmatpush1.msra.mxu0 0.0
        %527 = vmatprep.subr.mxu0 0.0
        %528 = vmatpush1.msra.mxu0 0.0
        %529 = vmatprep.subr.mxu0 0.0
        %530 = vmatpush1.msra.mxu0 0.0
        %531 = vmatprep.subr.mxu0 0.0
        %532 = vmatpush1.msra.mxu0 0.0
        %533 = vmatprep.subr.mxu0 0.0
        %534 = vmatpush1.msra.mxu0 0.0
        %535 = vmatprep.subr.mxu0 0.0
        %536 = vmatpush1.msra.mxu0 0.0
        %537 = vmatprep.subr.mxu0 0.0
        %538 = vmatpush1.msra.mxu0 0.0
        %539 = vmatprep.subr.mxu0 0.0
        %540 = vmatpush1.msra.mxu0 0.0
        %541 = vmatprep.subr.mxu0 0.0
        %542 = vmatpush1.msra.mxu0 0.0
        %543 = vmatprep.subr.mxu0 0.0
        %544 = vmatpush1.msra.mxu0 0.0
        %545 = vmatprep.subr.mxu0 0.0
        %546 = vmatpush1.msra.mxu0 0.0
        %547 = vmatprep.subr.mxu0 0.0
        %548 = vmatpush1.msra.mxu0 0.0
        %549 = vmatprep.subr.mxu0 0.0
        %550 = vmatpush1.msra.mxu0 0.0
        %551 = vmatprep.subr.mxu0 0.0
        %552 = vmatpush1.msra.mxu0 0.0
        %553 = vmatprep.subr.mxu0 0.0
        %554 = vmatpush1.msra.mxu0 0.0
        %555 = vmatprep.subr.mxu0 0.0
        %556 = vmatpush1.msra.mxu0 0.0
        %557 = vmatprep.subr.mxu0 0.0
        %558 = vmatpush1.msra.mxu0 0.0
        %559 = vmatprep.subr.mxu0 0.0
        %560 = vmatpush1.msra.mxu0 0.0
        %561 = vmatprep.subr.mxu0 0.0
        %562 = vmatpush1.msra.mxu0 0.0
        %563 = vmatprep.subr.mxu0 0.0
        %564 = vmatpush1.msra.mxu0 0.0
        %565 = vmatprep.subr.mxu0 0.0
        %566 = vmatpush1.msra.mxu0 0.0
        %567 = vmatprep.subr.mxu0 0.0
        %568 = vmatpush1.msra.mxu0 0.0
        %569 = vmatprep.subr.mxu0 0.0
        %570 = vmatpush1.msra.mxu0 0.0
        %571 = vmatprep.subr.mxu0 0.0
        %572 = vmatpush1.msra.mxu0 0.0
        %573 = vmatprep.subr.mxu0 0.0
        %574 = vmatpush1.msra.mxu0 0.0
        %575 = vmatprep.subr.mxu0 0.0
        %576 = vmatpush1.msra.mxu0 0.0
        %577 = vmatprep.subr.mxu0 0.0
        %578 = vmatpush1.msra.mxu0 0.0
        %579 = vmatprep.subr.mxu0 0.0
        %580 = vmatpush1.msra.mxu0 0.0
        %581 = vmatprep.subr.mxu0 0.0
        %582 = vmatpush1.msra.mxu0 0.0
        %583 = vmatprep.mubr.f32.mxu0 0.0
        %584 = vmatmul.mubr.f32.gmra.mrb[0].mxu0 %v511
        %v585 = vpop.f32.mrb[0].mxu0
        %v586 = vadd.f32 %v506, %v585
        %v587 = vpop.f32.mrb[0].mxu0
        %v588 = vadd.f32 %v508, %v587
        %589 = vdwg.mxu0
        %s590 = scalar_lea.vmem [#allocation5], 8
        %v591 = vld [vmem:[%s590] sm:$0xf]
        %v593 = vsel %vm428, %v591, 0
        %v596 = vsel %vm432, %v335, 0
        %v599 = vsel %vm432, %v336, 0
        %601 = vmatprep.subr.mxu0 %v599
        %602 = vmatpush1.msra.mxu0 %v596
        %603 = vmatprep.subr.mxu0 0.0
        %604 = vmatpush1.msra.mxu0 0.0
        %605 = vmatprep.subr.mxu0 0.0
        %606 = vmatpush1.msra.mxu0 0.0
        %607 = vmatprep.subr.mxu0 0.0
        %608 = vmatpush1.msra.mxu0 0.0
        %609 = vmatprep.subr.mxu0 0.0
        %610 = vmatpush1.msra.mxu0 0.0
        %611 = vmatprep.subr.mxu0 0.0
        %612 = vmatpush1.msra.mxu0 0.0
        %613 = vmatprep.subr.mxu0 0.0
        %614 = vmatpush1.msra.mxu0 0.0
        %615 = vmatprep.subr.mxu0 0.0
        %616 = vmatpush1.msra.mxu0 0.0
        %617 = vmatprep.subr.mxu0 0.0
        %618 = vmatpush1.msra.mxu0 0.0
        %619 = vmatprep.subr.mxu0 0.0
        %620 = vmatpush1.msra.mxu0 0.0
        %621 = vmatprep.subr.mxu0 0.0
        %622 = vmatpush1.msra.mxu0 0.0
        %623 = vmatprep.subr.mxu0 0.0
        %624 = vmatpush1.msra.mxu0 0.0
        %625 = vmatprep.subr.mxu0 0.0
        %626 = vmatpush1.msra.mxu0 0.0
        %627 = vmatprep.subr.mxu0 0.0
        %628 = vmatpush1.msra.mxu0 0.0
        %629 = vmatprep.subr.mxu0 0.0
        %630 = vmatpush1.msra.mxu0 0.0
        %631 = vmatprep.subr.mxu0 0.0
        %632 = vmatpush1.msra.mxu0 0.0
        %633 = vmatprep.subr.mxu0 0.0
        %634 = vmatpush1.msra.mxu0 0.0
        %635 = vmatprep.subr.mxu0 0.0
        %636 = vmatpush1.msra.mxu0 0.0
        %637 = vmatprep.subr.mxu0 0.0
        %638 = vmatpush1.msra.mxu0 0.0
        %639 = vmatprep.subr.mxu0 0.0
        %640 = vmatpush1.msra.mxu0 0.0
        %641 = vmatprep.subr.mxu0 0.0
        %642 = vmatpush1.msra.mxu0 0.0
        %643 = vmatprep.subr.mxu0 0.0
        %644 = vmatpush1.msra.mxu0 0.0
        %645 = vmatprep.subr.mxu0 0.0
        %646 = vmatpush1.msra.mxu0 0.0
        %647 = vmatprep.subr.mxu0 0.0
        %648 = vmatpush1.msra.mxu0 0.0
        %649 = vmatprep.subr.mxu0 0.0
        %650 = vmatpush1.msra.mxu0 0.0
        %651 = vmatprep.subr.mxu0 0.0
        %652 = vmatpush1.msra.mxu0 0.0
        %653 = vmatprep.subr.mxu0 0.0
        %654 = vmatpush1.msra.mxu0 0.0
        %655 = vmatprep.subr.mxu0 0.0
        %656 = vmatpush1.msra.mxu0 0.0
        %657 = vmatprep.subr.mxu0 0.0
        %658 = vmatpush1.msra.mxu0 0.0
        %659 = vmatprep.subr.mxu0 0.0
        %660 = vmatpush1.msra.mxu0 0.0
        %661 = vmatprep.subr.mxu0 0.0
        %662 = vmatpush1.msra.mxu0 0.0
        %663 = vmatprep.subr.mxu0 0.0
        %664 = vmatpush1.msra.mxu0 0.0
        %665 = vmatprep.mubr.f32.mxu0 0.0
        %666 = vmatmul.mubr.f32.gmra.mrb[0].mxu0 %v593
        %v667 = vpop.f32.mrb[0].mxu0
        %v668 = vadd.f32 0.0, %v667
        %v669 = vpop.f32.mrb[0].mxu0
        %v670 = vadd.f32 0.0, %v669
        %671 = vdwg.mxu0
        %v672 = vadd.f32 %v586, %v668
        %v673 = vadd.f32 %v588, %v670
        %s674 = scalar_lea.vmem [#allocation5], 12
        %v675 = vld [vmem:[%s674] sm:$0xf]
        %v677 = vsel %vm428, %v675, 0
        %v679 = vsel %vm432, %v243, 0
        %v681 = vsel %vm432, %v246, 0
        %683 = vmatprep.subr.mxu0 %v681
        %684 = vmatpush1.msra.mxu0 %v679
        %685 = vmatprep.subr.mxu0 0.0
        %686 = vmatpush1.msra.mxu0 0.0
        %687 = vmatprep.subr.mxu0 0.0
        %688 = vmatpush1.msra.mxu0 0.0
        %689 = vmatprep.subr.mxu0 0.0
        %690 = vmatpush1.msra.mxu0 0.0
        %691 = vmatprep.subr.mxu0 0.0
        %692 = vmatpush1.msra.mxu0 0.0
        %693 = vmatprep.subr.mxu0 0.0
        %694 = vmatpush1.msra.mxu0 0.0
        %695 = vmatprep.subr.mxu0 0.0
        %696 = vmatpush1.msra.mxu0 0.0
        %697 = vmatprep.subr.mxu0 0.0
        %698 = vmatpush1.msra.mxu0 0.0
        %699 = vmatprep.subr.mxu0 0.0
        %700 = vmatpush1.msra.mxu0 0.0
        %701 = vmatprep.subr.mxu0 0.0
        %702 = vmatpush1.msra.mxu0 0.0
        %703 = vmatprep.subr.mxu0 0.0
        %704 = vmatpush1.msra.mxu0 0.0
        %705 = vmatprep.subr.mxu0 0.0
        %706 = vmatpush1.msra.mxu0 0.0
        %707 = vmatprep.subr.mxu0 0.0
        %708 = vmatpush1.msra.mxu0 0.0
        %709 = vmatprep.subr.mxu0 0.0
        %710 = vmatpush1.msra.mxu0 0.0
        %711 = vmatprep.subr.mxu0 0.0
        %712 = vmatpush1.msra.mxu0 0.0
        %713 = vmatprep.subr.mxu0 0.0
        %714 = vmatpush1.msra.mxu0 0.0
        %715 = vmatprep.subr.mxu0 0.0
        %716 = vmatpush1.msra.mxu0 0.0
        %717 = vmatprep.subr.mxu0 0.0
        %718 = vmatpush1.msra.mxu0 0.0
        %719 = vmatprep.subr.mxu0 0.0
        %720 = vmatpush1.msra.mxu0 0.0
        %721 = vmatprep.subr.mxu0 0.0
        %722 = vmatpush1.msra.mxu0 0.0
        %723 = vmatprep.subr.mxu0 0.0
        %724 = vmatpush1.msra.mxu0 0.0
        %725 = vmatprep.subr.mxu0 0.0
        %726 = vmatpush1.msra.mxu0 0.0
        %727 = vmatprep.subr.mxu0 0.0
        %728 = vmatpush1.msra.mxu0 0.0
        %729 = vmatprep.subr.mxu0 0.0
        %730 = vmatpush1.msra.mxu0 0.0
        %731 = vmatprep.subr.mxu0 0.0
        %732 = vmatpush1.msra.mxu0 0.0
        %733 = vmatprep.subr.mxu0 0.0
        %734 = vmatpush1.msra.mxu0 0.0
        %735 = vmatprep.subr.mxu0 0.0
        %736 = vmatpush1.msra.mxu0 0.0
        %737 = vmatprep.subr.mxu0 0.0
        %738 = vmatpush1.msra.mxu0 0.0
        %739 = vmatprep.subr.mxu0 0.0
        %740 = vmatpush1.msra.mxu0 0.0
        %741 = vmatprep.subr.mxu0 0.0
        %742 = vmatpush1.msra.mxu0 0.0
        %743 = vmatprep.subr.mxu0 0.0
        %744 = vmatpush1.msra.mxu0 0.0
        %745 = vmatprep.subr.mxu0 0.0
        %746 = vmatpush1.msra.mxu0 0.0
        %747 = vmatprep.mubr.f32.mxu0 0.0
        %748 = vmatmul.mubr.f32.gmra.mrb[0].mxu0 %v677
        %v749 = vpop.f32.mrb[0].mxu0
        %v750 = vadd.f32 0.0, %v749
        %v751 = vpop.f32.mrb[0].mxu0
        %v752 = vadd.f32 0.0, %v751
        %753 = vdwg.mxu0
        %v754 = vadd.f32 %v672, %v750
        %v755 = vadd.f32 %v673, %v752
        %757 = vset.pattern.permute.xlu0 0
        %758 = vperm.xlu0 %757, %v244
        %v759 = vpop.permute.xlu0 %758
        %v761 = vadd.f32 %v754, %v759
        %v762 = vadd.f32 %v755, %v759
        %v765 = vcombine.low %v761, %v762
        %767 = vst [vmem:[%s242] sm:$0xff] %v765
        %s768 = scalar_lea.vmem [#allocation5], 16
        %v769 = vld [vmem:[%s768] sm:$0xf]
        %s770 = scalar_lea.vmem [#allocation5], 20
        %v771 = vld [vmem:[%s770] sm:$0xf]
        %v773 = vsel %vm428, %v771, 0
        %v776 = vsel %vm432, %v313, 0
        %v779 = vsel %vm432, %v314, 0
        %781 = vmatprep.subr.mxu0 %v779
        %782 = vmatpush1.msra.mxu0 %v776
        %783 = vmatprep.subr.mxu0 0.0
        %784 = vmatpush1.msra.mxu0 0.0
        %785 = vmatprep.subr.mxu0 0.0
        %786 = vmatpush1.msra.mxu0 0.0
        %787 = vmatprep.subr.mxu0 0.0
        %788 = vmatpush1.msra.mxu0 0.0
        %789 = vmatprep.subr.mxu0 0.0
        %790 = vmatpush1.msra.mxu0 0.0
        %791 = vmatprep.subr.mxu0 0.0
        %792 = vmatpush1.msra.mxu0 0.0
        %793 = vmatprep.subr.mxu0 0.0
        %794 = vmatpush1.msra.mxu0 0.0
        %795 = vmatprep.subr.mxu0 0.0
        %796 = vmatpush1.msra.mxu0 0.0
        %797 = vmatprep.subr.mxu0 0.0
        %798 = vmatpush1.msra.mxu0 0.0
        %799 = vmatprep.subr.mxu0 0.0
        %800 = vmatpush1.msra.mxu0 0.0
        %801 = vmatprep.subr.mxu0 0.0
        %802 = vmatpush1.msra.mxu0 0.0
        %803 = vmatprep.subr.mxu0 0.0
        %804 = vmatpush1.msra.mxu0 0.0
        %805 = vmatprep.subr.mxu0 0.0
        %806 = vmatpush1.msra.mxu0 0.0
        %807 = vmatprep.subr.mxu0 0.0
        %808 = vmatpush1.msra.mxu0 0.0
        %809 = vmatprep.subr.mxu0 0.0
        %810 = vmatpush1.msra.mxu0 0.0
        %811 = vmatprep.subr.mxu0 0.0
        %812 = vmatpush1.msra.mxu0 0.0
        %813 = vmatprep.subr.mxu0 0.0
        %814 = vmatpush1.msra.mxu0 0.0
        %815 = vmatprep.subr.mxu0 0.0
        %816 = vmatpush1.msra.mxu0 0.0
        %817 = vmatprep.subr.mxu0 0.0
        %818 = vmatpush1.msra.mxu0 0.0
        %819 = vmatprep.subr.mxu0 0.0
        %820 = vmatpush1.msra.mxu0 0.0
        %821 = vmatprep.subr.mxu0 0.0
        %822 = vmatpush1.msra.mxu0 0.0
        %823 = vmatprep.subr.mxu0 0.0
        %824 = vmatpush1.msra.mxu0 0.0
        %825 = vmatprep.subr.mxu0 0.0
        %826 = vmatpush1.msra.mxu0 0.0
        %827 = vmatprep.subr.mxu0 0.0
        %828 = vmatpush1.msra.mxu0 0.0
        %829 = vmatprep.subr.mxu0 0.0
        %830 = vmatpush1.msra.mxu0 0.0
        %831 = vmatprep.subr.mxu0 0.0
        %832 = vmatpush1.msra.mxu0 0.0
        %833 = vmatprep.subr.mxu0 0.0
        %834 = vmatpush1.msra.mxu0 0.0
        %835 = vmatprep.subr.mxu0 0.0
        %836 = vmatpush1.msra.mxu0 0.0
        %837 = vmatprep.subr.mxu0 0.0
        %838 = vmatpush1.msra.mxu0 0.0
        %839 = vmatprep.subr.mxu0 0.0
        %840 = vmatpush1.msra.mxu0 0.0
        %841 = vmatprep.subr.mxu0 0.0
        %842 = vmatpush1.msra.mxu0 0.0
        %843 = vmatprep.subr.mxu0 0.0
        %844 = vmatpush1.msra.mxu0 0.0
        %845 = vmatprep.mubr.f32.mxu0 0.0
        %846 = vmatmul.mubr.f32.gmra.mrb[0].mxu0 %v773
        %v847 = vpop.f32.mrb[0].mxu0
        %v848 = vadd.f32 0.0, %v847
        %v849 = vpop.f32.mrb[0].mxu0
        %v850 = vadd.f32 0.0, %v849
        %851 = vdwg.mxu0
        %v853 = vsel %vm428, %v769, 0
        %855 = vmatprep.subr.mxu0 %v437
        %856 = vmatpush1.msra.mxu0 %v434
        %857 = vmatprep.subr.mxu0 0.0
        %858 = vmatpush1.msra.mxu0 0.0
        %859 = vmatprep.subr.mxu0 0.0
        %860 = vmatpush1.msra.mxu0 0.0
        %861 = vmatprep.subr.mxu0 0.0
        %862 = vmatpush1.msra.mxu0 0.0
        %863 = vmatprep.subr.mxu0 0.0
        %864 = vmatpush1.msra.mxu0 0.0
        %865 = vmatprep.subr.mxu0 0.0
        %866 = vmatpush1.msra.mxu0 0.0
        %867 = vmatprep.subr.mxu0 0.0
        %868 = vmatpush1.msra.mxu0 0.0
        %869 = vmatprep.subr.mxu0 0.0
        %870 = vmatpush1.msra.mxu0 0.0
        %871 = vmatprep.subr.mxu0 0.0
        %872 = vmatpush1.msra.mxu0 0.0
        %873 = vmatprep.subr.mxu0 0.0
        %874 = vmatpush1.msra.mxu0 0.0
        %875 = vmatprep.subr.mxu0 0.0
        %876 = vmatpush1.msra.mxu0 0.0
        %877 = vmatprep.subr.mxu0 0.0
        %878 = vmatpush1.msra.mxu0 0.0
        %879 = vmatprep.subr.mxu0 0.0
        %880 = vmatpush1.msra.mxu0 0.0
        %881 = vmatprep.subr.mxu0 0.0
        %882 = vmatpush1.msra.mxu0 0.0
        %883 = vmatprep.subr.mxu0 0.0
        %884 = vmatpush1.msra.mxu0 0.0
        %885 = vmatprep.subr.mxu0 0.0
        %886 = vmatpush1.msra.mxu0 0.0
        %887 = vmatprep.subr.mxu0 0.0
        %888 = vmatpush1.msra.mxu0 0.0
        %889 = vmatprep.subr.mxu0 0.0
        %890 = vmatpush1.msra.mxu0 0.0
        %891 = vmatprep.subr.mxu0 0.0
        %892 = vmatpush1.msra.mxu0 0.0
        %893 = vmatprep.subr.mxu0 0.0
        %894 = vmatpush1.msra.mxu0 0.0
        %895 = vmatprep.subr.mxu0 0.0
        %896 = vmatpush1.msra.mxu0 0.0
        %897 = vmatprep.subr.mxu0 0.0
        %898 = vmatpush1.msra.mxu0 0.0
        %899 = vmatprep.subr.mxu0 0.0
        %900 = vmatpush1.msra.mxu0 0.0
        %901 = vmatprep.subr.mxu0 0.0
        %902 = vmatpush1.msra.mxu0 0.0
        %903 = vmatprep.subr.mxu0 0.0
        %904 = vmatpush1.msra.mxu0 0.0
        %905 = vmatprep.subr.mxu0 0.0
        %906 = vmatpush1.msra.mxu0 0.0
        %907 = vmatprep.subr.mxu0 0.0
        %908 = vmatpush1.msra.mxu0 0.0
        %909 = vmatprep.subr.mxu0 0.0
        %910 = vmatpush1.msra.mxu0 0.0
        %911 = vmatprep.subr.mxu0 0.0
        %912 = vmatpush1.msra.mxu0 0.0
        %913 = vmatprep.subr.mxu0 0.0
        %914 = vmatpush1.msra.mxu0 0.0
        %915 = vmatprep.subr.mxu0 0.0
        %916 = vmatpush1.msra.mxu0 0.0
        %917 = vmatprep.subr.mxu0 0.0
        %918 = vmatpush1.msra.mxu0 0.0
        %919 = vmatprep.mubr.f32.mxu0 0.0
        %920 = vmatmul.mubr.f32.gmra.mrb[0].mxu0 %v853
        %v921 = vpop.f32.mrb[0].mxu0
        %v922 = vadd.f32 %v848, %v921
        %v923 = vpop.f32.mrb[0].mxu0
        %v924 = vadd.f32 %v850, %v923
        %925 = vdwg.mxu0
        %s926 = scalar_lea.vmem [#allocation5], 24
        %v927 = vld [vmem:[%s926] sm:$0xf]
        %v929 = vsel %vm428, %v927, 0
        %931 = vmatprep.subr.mxu0 %v681
        %932 = vmatpush1.msra.mxu0 %v679
        %933 = vmatprep.subr.mxu0 0.0
        %934 = vmatpush1.msra.mxu0 0.0
        %935 = vmatprep.subr.mxu0 0.0
        %936 = vmatpush1.msra.mxu0 0.0
        %937 = vmatprep.subr.mxu0 0.0
        %938 = vmatpush1.msra.mxu0 0.0
        %939 = vmatprep.subr.mxu0 0.0
        %940 = vmatpush1.msra.mxu0 0.0
        %941 = vmatprep.subr.mxu0 0.0
        %942 = vmatpush1.msra.mxu0 0.0
        %943 = vmatprep.subr.mxu0 0.0
        %944 = vmatpush1.msra.mxu0 0.0
        %945 = vmatprep.subr.mxu0 0.0
        %946 = vmatpush1.msra.mxu0 0.0
        %947 = vmatprep.subr.mxu0 0.0
        %948 = vmatpush1.msra.mxu0 0.0
        %949 = vmatprep.subr.mxu0 0.0
        %950 = vmatpush1.msra.mxu0 0.0
        %951 = vmatprep.subr.mxu0 0.0
        %952 = vmatpush1.msra.mxu0 0.0
        %953 = vmatprep.subr.mxu0 0.0
        %954 = vmatpush1.msra.mxu0 0.0
        %955 = vmatprep.subr.mxu0 0.0
        %956 = vmatpush1.msra.mxu0 0.0
        %957 = vmatprep.subr.mxu0 0.0
        %958 = vmatpush1.msra.mxu0 0.0
        %959 = vmatprep.subr.mxu0 0.0
        %960 = vmatpush1.msra.mxu0 0.0
        %961 = vmatprep.subr.mxu0 0.0
        %962 = vmatpush1.msra.mxu0 0.0
        %963 = vmatprep.subr.mxu0 0.0
        %964 = vmatpush1.msra.mxu0 0.0
        %965 = vmatprep.subr.mxu0 0.0
        %966 = vmatpush1.msra.mxu0 0.0
        %967 = vmatprep.subr.mxu0 0.0
        %968 = vmatpush1.msra.mxu0 0.0
        %969 = vmatprep.subr.mxu0 0.0
        %970 = vmatpush1.msra.mxu0 0.0
        %971 = vmatprep.subr.mxu0 0.0
        %972 = vmatpush1.msra.mxu0 0.0
        %973 = vmatprep.subr.mxu0 0.0
        %974 = vmatpush1.msra.mxu0 0.0
        %975 = vmatprep.subr.mxu0 0.0
        %976 = vmatpush1.msra.mxu0 0.0
        %977 = vmatprep.subr.mxu0 0.0
        %978 = vmatpush1.msra.mxu0 0.0
        %979 = vmatprep.subr.mxu0 0.0
        %980 = vmatpush1.msra.mxu0 0.0
        %981 = vmatprep.subr.mxu0 0.0
        %982 = vmatpush1.msra.mxu0 0.0
        %983 = vmatprep.subr.mxu0 0.0
        %984 = vmatpush1.msra.mxu0 0.0
        %985 = vmatprep.subr.mxu0 0.0
        %986 = vmatpush1.msra.mxu0 0.0
        %987 = vmatprep.subr.mxu0 0.0
        %988 = vmatpush1.msra.mxu0 0.0
        %989 = vmatprep.subr.mxu0 0.0
        %990 = vmatpush1.msra.mxu0 0.0
        %991 = vmatprep.subr.mxu0 0.0
        %992 = vmatpush1.msra.mxu0 0.0
        %993 = vmatprep.subr.mxu0 0.0
        %994 = vmatpush1.msra.mxu0 0.0
        %995 = vmatprep.mubr.f32.mxu0 0.0
        %996 = vmatmul.mubr.f32.gmra.mrb[0].mxu0 %v929
        %v997 = vpop.f32.mrb[0].mxu0
        %v998 = vadd.f32 0.0, %v997
        %v999 = vpop.f32.mrb[0].mxu0
        %v1000 = vadd.f32 0.0, %v999
        %1001 = vdwg.mxu0
        %v1002 = vadd.f32 %v922, %v998
        %v1003 = vadd.f32 %v924, %v1000
        %s1004 = scalar_lea.vmem [#allocation5], 28
        %v1005 = vld [vmem:[%s1004] sm:$0xf]
        %v1007 = vsel %vm428, %v1005, 0
        %v1010 = vsel %vm432, %v357, 0
        %v1013 = vsel %vm432, %v358, 0
        %1015 = vmatprep.subr.mxu0 %v1013
        %1016 = vmatpush1.msra.mxu0 %v1010
        %1017 = vmatprep.subr.mxu0 0.0
        %1018 = vmatpush1.msra.mxu0 0.0
        %1019 = vmatprep.subr.mxu0 0.0
        %1020 = vmatpush1.msra.mxu0 0.0
        %1021 = vmatprep.subr.mxu0 0.0
        %1022 = vmatpush1.msra.mxu0 0.0
        %1023 = vmatprep.subr.mxu0 0.0
        %1024 = vmatpush1.msra.mxu0 0.0
        %1025 = vmatprep.subr.mxu0 0.0
        %1026 = vmatpush1.msra.mxu0 0.0
        %1027 = vmatprep.subr.mxu0 0.0
        %1028 = vmatpush1.msra.mxu0 0.0
        %1029 = vmatprep.subr.mxu0 0.0
        %1030 = vmatpush1.msra.mxu0 0.0
        %1031 = vmatprep.subr.mxu0 0.0
        %1032 = vmatpush1.msra.mxu0 0.0
        %1033 = vmatprep.subr.mxu0 0.0
        %1034 = vmatpush1.msra.mxu0 0.0
        %1035 = vmatprep.subr.mxu0 0.0
        %1036 = vmatpush1.msra.mxu0 0.0
        %1037 = vmatprep.subr.mxu0 0.0
        %1038 = vmatpush1.msra.mxu0 0.0
        %1039 = vmatprep.subr.mxu0 0.0
        %1040 = vmatpush1.msra.mxu0 0.0
        %1041 = vmatprep.subr.mxu0 0.0
        %1042 = vmatpush1.msra.mxu0 0.0
        %1043 = vmatprep.subr.mxu0 0.0
        %1044 = vmatpush1.msra.mxu0 0.0
        %1045 = vmatprep.subr.mxu0 0.0
        %1046 = vmatpush1.msra.mxu0 0.0
        %1047 = vmatprep.subr.mxu0 0.0
        %1048 = vmatpush1.msra.mxu0 0.0
        %1049 = vmatprep.subr.mxu0 0.0
        %1050 = vmatpush1.msra.mxu0 0.0
        %1051 = vmatprep.subr.mxu0 0.0
        %1052 = vmatpush1.msra.mxu0 0.0
        %1053 = vmatprep.subr.mxu0 0.0
        %1054 = vmatpush1.msra.mxu0 0.0
        %1055 = vmatprep.subr.mxu0 0.0
        %1056 = vmatpush1.msra.mxu0 0.0
        %1057 = vmatprep.subr.mxu0 0.0
        %1058 = vmatpush1.msra.mxu0 0.0
        %1059 = vmatprep.subr.mxu0 0.0
        %1060 = vmatpush1.msra.mxu0 0.0
        %1061 = vmatprep.subr.mxu0 0.0
        %1062 = vmatpush1.msra.mxu0 0.0
        %1063 = vmatprep.subr.mxu0 0.0
        %1064 = vmatpush1.msra.mxu0 0.0
        %1065 = vmatprep.subr.mxu0 0.0
        %1066 = vmatpush1.msra.mxu0 0.0
        %1067 = vmatprep.subr.mxu0 0.0
        %1068 = vmatpush1.msra.mxu0 0.0
        %1069 = vmatprep.subr.mxu0 0.0
        %1070 = vmatpush1.msra.mxu0 0.0
        %1071 = vmatprep.subr.mxu0 0.0
        %1072 = vmatpush1.msra.mxu0 0.0
        %1073 = vmatprep.subr.mxu0 0.0
        %1074 = vmatpush1.msra.mxu0 0.0
        %1075 = vmatprep.subr.mxu0 0.0
        %1076 = vmatpush1.msra.mxu0 0.0
        %1077 = vmatprep.subr.mxu0 0.0
        %1078 = vmatpush1.msra.mxu0 0.0
        %1079 = vmatprep.mubr.f32.mxu0 0.0
        %1080 = vmatmul.mubr.f32.gmra.mrb[0].mxu0 %v1007
        %v1081 = vpop.f32.mrb[0].mxu0
        %v1082 = vadd.f32 0.0, %v1081
        %v1083 = vpop.f32.mrb[0].mxu0
        %v1084 = vadd.f32 0.0, %v1083
        %1085 = vdwg.mxu0
        %v1086 = vadd.f32 %v1002, %v1082
        %v1087 = vadd.f32 %v1003, %v1084
        %v1088 = vadd.f32 %v1086, %v759
        %v1089 = vadd.f32 %v1087, %v759
        %v1092 = vcombine.low %v1088, %v1089
        %s1094 = scalar_lea.vmem %s242, 8 [#allocation8]
        %1095 = vst [vmem:[%s1094] sm:$0xff] %v1092
        %s1096 = scalar_lea.vmem [#allocation5], 32
        %v1097 = vld [vmem:[%s1096] sm:$0xf]
        %s1098 = scalar_lea.vmem [#allocation5], 36
        %v1099 = vld [vmem:[%s1098] sm:$0xf]
        %v1101 = vsel %vm428, %v1099, 0
        %1103 = vmatprep.subr.mxu0 %v681
        %1104 = vmatpush1.msra.mxu0 %v679
        %1105 = vmatprep.subr.mxu0 0.0
        %1106 = vmatpush1.msra.mxu0 0.0
        %1107 = vmatprep.subr.mxu0 0.0
        %1108 = vmatpush1.msra.mxu0 0.0
        %1109 = vmatprep.subr.mxu0 0.0
        %1110 = vmatpush1.msra.mxu0 0.0
        %1111 = vmatprep.subr.mxu0 0.0
        %1112 = vmatpush1.msra.mxu0 0.0
        %1113 = vmatprep.subr.mxu0 0.0
        %1114 = vmatpush1.msra.mxu0 0.0
        %1115 = vmatprep.subr.mxu0 0.0
        %1116 = vmatpush1.msra.mxu0 0.0
        %1117 = vmatprep.subr.mxu0 0.0
        %1118 = vmatpush1.msra.mxu0 0.0
        %1119 = vmatprep.subr.mxu0 0.0
        %1120 = vmatpush1.msra.mxu0 0.0
        %1121 = vmatprep.subr.mxu0 0.0
        %1122 = vmatpush1.msra.mxu0 0.0
        %1123 = vmatprep.subr.mxu0 0.0
        %1124 = vmatpush1.msra.mxu0 0.0
        %1125 = vmatprep.subr.mxu0 0.0
        %1126 = vmatpush1.msra.mxu0 0.0
        %1127 = vmatprep.subr.mxu0 0.0
        %1128 = vmatpush1.msra.mxu0 0.0
        %1129 = vmatprep.subr.mxu0 0.0
        %1130 = vmatpush1.msra.mxu0 0.0
        %1131 = vmatprep.subr.mxu0 0.0
        %1132 = vmatpush1.msra.mxu0 0.0
        %1133 = vmatprep.subr.mxu0 0.0
        %1134 = vmatpush1.msra.mxu0 0.0
        %1135 = vmatprep.subr.mxu0 0.0
        %1136 = vmatpush1.msra.mxu0 0.0
        %1137 = vmatprep.subr.mxu0 0.0
        %1138 = vmatpush1.msra.mxu0 0.0
        %1139 = vmatprep.subr.mxu0 0.0
        %1140 = vmatpush1.msra.mxu0 0.0
        %1141 = vmatprep.subr.mxu0 0.0
        %1142 = vmatpush1.msra.mxu0 0.0
        %1143 = vmatprep.subr.mxu0 0.0
        %1144 = vmatpush1.msra.mxu0 0.0
        %1145 = vmatprep.subr.mxu0 0.0
        %1146 = vmatpush1.msra.mxu0 0.0
        %1147 = vmatprep.subr.mxu0 0.0
        %1148 = vmatpush1.msra.mxu0 0.0
        %1149 = vmatprep.subr.mxu0 0.0
        %1150 = vmatpush1.msra.mxu0 0.0
        %1151 = vmatprep.subr.mxu0 0.0
        %1152 = vmatpush1.msra.mxu0 0.0
        %1153 = vmatprep.subr.mxu0 0.0
        %1154 = vmatpush1.msra.mxu0 0.0
        %1155 = vmatprep.subr.mxu0 0.0
        %1156 = vmatpush1.msra.mxu0 0.0
        %1157 = vmatprep.subr.mxu0 0.0
        %1158 = vmatpush1.msra.mxu0 0.0
        %1159 = vmatprep.subr.mxu0 0.0
        %1160 = vmatpush1.msra.mxu0 0.0
        %1161 = vmatprep.subr.mxu0 0.0
        %1162 = vmatpush1.msra.mxu0 0.0
        %1163 = vmatprep.subr.mxu0 0.0
        %1164 = vmatpush1.msra.mxu0 0.0
        %1165 = vmatprep.subr.mxu0 0.0
        %1166 = vmatpush1.msra.mxu0 0.0
        %1167 = vmatprep.mubr.f32.mxu0 0.0
        %1168 = vmatmul.mubr.f32.gmra.mrb[0].mxu0 %v1101
        %v1169 = vpop.f32.mrb[0].mxu0
        %v1170 = vadd.f32 0.0, %v1169
        %v1171 = vpop.f32.mrb[0].mxu0
        %v1172 = vadd.f32 0.0, %v1171
        %1173 = vdwg.mxu0
        %v1175 = vsel %vm428, %v1097, 0
        %1177 = vmatprep.subr.mxu0 %v599
        %1178 = vmatpush1.msra.mxu0 %v596
        %1179 = vmatprep.subr.mxu0 0.0
        %1180 = vmatpush1.msra.mxu0 0.0
        %1181 = vmatprep.subr.mxu0 0.0
        %1182 = vmatpush1.msra.mxu0 0.0
        %1183 = vmatprep.subr.mxu0 0.0
        %1184 = vmatpush1.msra.mxu0 0.0
        %1185 = vmatprep.subr.mxu0 0.0
        %1186 = vmatpush1.msra.mxu0 0.0
        %1187 = vmatprep.subr.mxu0 0.0
        %1188 = vmatpush1.msra.mxu0 0.0
        %1189 = vmatprep.subr.mxu0 0.0
        %1190 = vmatpush1.msra.mxu0 0.0
        %1191 = vmatprep.subr.mxu0 0.0
        %1192 = vmatpush1.msra.mxu0 0.0
        %1193 = vmatprep.subr.mxu0 0.0
        %1194 = vmatpush1.msra.mxu0 0.0
        %1195 = vmatprep.subr.mxu0 0.0
        %1196 = vmatpush1.msra.mxu0 0.0
        %1197 = vmatprep.subr.mxu0 0.0
        %1198 = vmatpush1.msra.mxu0 0.0
        %1199 = vmatprep.subr.mxu0 0.0
        %1200 = vmatpush1.msra.mxu0 0.0
        %1201 = vmatprep.subr.mxu0 0.0
        %1202 = vmatpush1.msra.mxu0 0.0
        %1203 = vmatprep.subr.mxu0 0.0
        %1204 = vmatpush1.msra.mxu0 0.0
        %1205 = vmatprep.subr.mxu0 0.0
        %1206 = vmatpush1.msra.mxu0 0.0
        %1207 = vmatprep.subr.mxu0 0.0
        %1208 = vmatpush1.msra.mxu0 0.0
        %1209 = vmatprep.subr.mxu0 0.0
        %1210 = vmatpush1.msra.mxu0 0.0
        %1211 = vmatprep.subr.mxu0 0.0
        %1212 = vmatpush1.msra.mxu0 0.0
        %1213 = vmatprep.subr.mxu0 0.0
        %1214 = vmatpush1.msra.mxu0 0.0
        %1215 = vmatprep.subr.mxu0 0.0
        %1216 = vmatpush1.msra.mxu0 0.0
        %1217 = vmatprep.subr.mxu0 0.0
        %1218 = vmatpush1.msra.mxu0 0.0
        %1219 = vmatprep.subr.mxu0 0.0
        %1220 = vmatpush1.msra.mxu0 0.0
        %1221 = vmatprep.subr.mxu0 0.0
        %1222 = vmatpush1.msra.mxu0 0.0
        %1223 = vmatprep.subr.mxu0 0.0
        %1224 = vmatpush1.msra.mxu0 0.0
        %1225 = vmatprep.subr.mxu0 0.0
        %1226 = vmatpush1.msra.mxu0 0.0
        %1227 = vmatprep.subr.mxu0 0.0
        %1228 = vmatpush1.msra.mxu0 0.0
        %1229 = vmatprep.subr.mxu0 0.0
        %1230 = vmatpush1.msra.mxu0 0.0
        %1231 = vmatprep.subr.mxu0 0.0
        %1232 = vmatpush1.msra.mxu0 0.0
        %1233 = vmatprep.subr.mxu0 0.0
        %1234 = vmatpush1.msra.mxu0 0.0
        %1235 = vmatprep.subr.mxu0 0.0
        %1236 = vmatpush1.msra.mxu0 0.0
        %1237 = vmatprep.subr.mxu0 0.0
        %1238 = vmatpush1.msra.mxu0 0.0
        %1239 = vmatprep.subr.mxu0 0.0
        %1240 = vmatpush1.msra.mxu0 0.0
        %1241 = vmatprep.mubr.f32.mxu0 0.0
        %1242 = vmatmul.mubr.f32.gmra.mrb[0].mxu0 %v1175
        %v1243 = vpop.f32.mrb[0].mxu0
        %v1244 = vadd.f32 %v1170, %v1243
        %v1245 = vpop.f32.mrb[0].mxu0
        %v1246 = vadd.f32 %v1172, %v1245
        %1247 = vdwg.mxu0
        %s1248 = scalar_lea.vmem [#allocation5], 40
        %v1249 = vld [vmem:[%s1248] sm:$0xf]
        %v1251 = vsel %vm428, %v1249, 0
        %v1254 = vsel %vm432, %v379, 0
        %v1257 = vsel %vm432, %v380, 0
        %1259 = vmatprep.subr.mxu0 %v1257
        %1260 = vmatpush1.msra.mxu0 %v1254
        %1261 = vmatprep.subr.mxu0 0.0
        %1262 = vmatpush1.msra.mxu0 0.0
        %1263 = vmatprep.subr.mxu0 0.0
        %1264 = vmatpush1.msra.mxu0 0.0
        %1265 = vmatprep.subr.mxu0 0.0
        %1266 = vmatpush1.msra.mxu0 0.0
        %1267 = vmatprep.subr.mxu0 0.0
        %1268 = vmatpush1.msra.mxu0 0.0
        %1269 = vmatprep.subr.mxu0 0.0
        %1270 = vmatpush1.msra.mxu0 0.0
        %1271 = vmatprep.subr.mxu0 0.0
        %1272 = vmatpush1.msra.mxu0 0.0
        %1273 = vmatprep.subr.mxu0 0.0
        %1274 = vmatpush1.msra.mxu0 0.0
        %1275 = vmatprep.subr.mxu0 0.0
        %1276 = vmatpush1.msra.mxu0 0.0
        %1277 = vmatprep.subr.mxu0 0.0
        %1278 = vmatpush1.msra.mxu0 0.0
        %1279 = vmatprep.subr.mxu0 0.0
        %1280 = vmatpush1.msra.mxu0 0.0
        %1281 = vmatprep.subr.mxu0 0.0
        %1282 = vmatpush1.msra.mxu0 0.0
        %1283 = vmatprep.subr.mxu0 0.0
        %1284 = vmatpush1.msra.mxu0 0.0
        %1285 = vmatprep.subr.mxu0 0.0
        %1286 = vmatpush1.msra.mxu0 0.0
        %1287 = vmatprep.subr.mxu0 0.0
        %1288 = vmatpush1.msra.mxu0 0.0
        %1289 = vmatprep.subr.mxu0 0.0
        %1290 = vmatpush1.msra.mxu0 0.0
        %1291 = vmatprep.subr.mxu0 0.0
        %1292 = vmatpush1.msra.mxu0 0.0
        %1293 = vmatprep.subr.mxu0 0.0
        %1294 = vmatpush1.msra.mxu0 0.0
        %1295 = vmatprep.subr.mxu0 0.0
        %1296 = vmatpush1.msra.mxu0 0.0
        %1297 = vmatprep.subr.mxu0 0.0
        %1298 = vmatpush1.msra.mxu0 0.0
        %1299 = vmatprep.subr.mxu0 0.0
        %1300 = vmatpush1.msra.mxu0 0.0
        %1301 = vmatprep.subr.mxu0 0.0
        %1302 = vmatpush1.msra.mxu0 0.0
        %1303 = vmatprep.subr.mxu0 0.0
        %1304 = vmatpush1.msra.mxu0 0.0
        %1305 = vmatprep.subr.mxu0 0.0
        %1306 = vmatpush1.msra.mxu0 0.0
        %1307 = vmatprep.subr.mxu0 0.0
        %1308 = vmatpush1.msra.mxu0 0.0
        %1309 = vmatprep.subr.mxu0 0.0
        %1310 = vmatpush1.msra.mxu0 0.0
        %1311 = vmatprep.subr.mxu0 0.0
        %1312 = vmatpush1.msra.mxu0 0.0
        %1313 = vmatprep.subr.mxu0 0.0
        %1314 = vmatpush1.msra.mxu0 0.0
        %1315 = vmatprep.subr.mxu0 0.0
        %1316 = vmatpush1.msra.mxu0 0.0
        %1317 = vmatprep.subr.mxu0 0.0
        %1318 = vmatpush1.msra.mxu0 0.0
        %1319 = vmatprep.subr.mxu0 0.0
        %1320 = vmatpush1.msra.mxu0 0.0
        %1321 = vmatprep.subr.mxu0 0.0
        %1322 = vmatpush1.msra.mxu0 0.0
        %1323 = vmatprep.mubr.f32.mxu0 0.0
        %1324 = vmatmul.mubr.f32.gmra.mrb[0].mxu0 %v1251
        %v1325 = vpop.f32.mrb[0].mxu0
        %v1326 = vadd.f32 0.0, %v1325
        %v1327 = vpop.f32.mrb[0].mxu0
        %v1328 = vadd.f32 0.0, %v1327
        %1329 = vdwg.mxu0
        %v1330 = vadd.f32 %v1244, %v1326
        %v1331 = vadd.f32 %v1246, %v1328
        %s1332 = scalar_lea.vmem [#allocation5], 44
        %v1333 = vld [vmem:[%s1332] sm:$0xf]
        %v1335 = vsel %vm428, %v1333, 0
        %v1338 = vsel %vm432, %v401, 0
        %v1341 = vsel %vm432, %v402, 0
        %1343 = vmatprep.subr.mxu0 %v1341
        %1344 = vmatpush1.msra.mxu0 %v1338
        %1345 = vmatprep.subr.mxu0 0.0
        %1346 = vmatpush1.msra.mxu0 0.0
        %1347 = vmatprep.subr.mxu0 0.0
        %1348 = vmatpush1.msra.mxu0 0.0
        %1349 = vmatprep.subr.mxu0 0.0
        %1350 = vmatpush1.msra.mxu0 0.0
        %1351 = vmatprep.subr.mxu0 0.0
        %1352 = vmatpush1.msra.mxu0 0.0
        %1353 = vmatprep.subr.mxu0 0.0
        %1354 = vmatpush1.msra.mxu0 0.0
        %1355 = vmatprep.subr.mxu0 0.0
        %1356 = vmatpush1.msra.mxu0 0.0
        %1357 = vmatprep.subr.mxu0 0.0
        %1358 = vmatpush1.msra.mxu0 0.0
        %1359 = vmatprep.subr.mxu0 0.0
        %1360 = vmatpush1.msra.mxu0 0.0
        %1361 = vmatprep.subr.mxu0 0.0
        %1362 = vmatpush1.msra.mxu0 0.0
        %1363 = vmatprep.subr.mxu0 0.0
        %1364 = vmatpush1.msra.mxu0 0.0
        %1365 = vmatprep.subr.mxu0 0.0
        %1366 = vmatpush1.msra.mxu0 0.0
        %1367 = vmatprep.subr.mxu0 0.0
        %1368 = vmatpush1.msra.mxu0 0.0
        %1369 = vmatprep.subr.mxu0 0.0
        %1370 = vmatpush1.msra.mxu0 0.0
        %1371 = vmatprep.subr.mxu0 0.0
        %1372 = vmatpush1.msra.mxu0 0.0
        %1373 = vmatprep.subr.mxu0 0.0
        %1374 = vmatpush1.msra.mxu0 0.0
        %1375 = vmatprep.subr.mxu0 0.0
        %1376 = vmatpush1.msra.mxu0 0.0
        %1377 = vmatprep.subr.mxu0 0.0
        %1378 = vmatpush1.msra.mxu0 0.0
        %1379 = vmatprep.subr.mxu0 0.0
        %1380 = vmatpush1.msra.mxu0 0.0
        %1381 = vmatprep.subr.mxu0 0.0
        %1382 = vmatpush1.msra.mxu0 0.0
        %1383 = vmatprep.subr.mxu0 0.0
        %1384 = vmatpush1.msra.mxu0 0.0
        %1385 = vmatprep.subr.mxu0 0.0
        %1386 = vmatpush1.msra.mxu0 0.0
        %1387 = vmatprep.subr.mxu0 0.0
        %1388 = vmatpush1.msra.mxu0 0.0
        %1389 = vmatprep.subr.mxu0 0.0
        %1390 = vmatpush1.msra.mxu0 0.0
        %1391 = vmatprep.subr.mxu0 0.0
        %1392 = vmatpush1.msra.mxu0 0.0
        %1393 = vmatprep.subr.mxu0 0.0
        %1394 = vmatpush1.msra.mxu0 0.0
        %1395 = vmatprep.subr.mxu0 0.0
        %1396 = vmatpush1.msra.mxu0 0.0
        %1397 = vmatprep.subr.mxu0 0.0
        %1398 = vmatpush1.msra.mxu0 0.0
        %1399 = vmatprep.subr.mxu0 0.0
        %1400 = vmatpush1.msra.mxu0 0.0
        %1401 = vmatprep.subr.mxu0 0.0
        %1402 = vmatpush1.msra.mxu0 0.0
        %1403 = vmatprep.subr.mxu0 0.0
        %1404 = vmatpush1.msra.mxu0 0.0
        %1405 = vmatprep.subr.mxu0 0.0
        %1406 = vmatpush1.msra.mxu0 0.0
        %1407 = vmatprep.mubr.f32.mxu0 0.0
        %1408 = vmatmul.mubr.f32.gmra.mrb[0].mxu0 %v1335
        %v1409 = vpop.f32.mrb[0].mxu0
        %v1410 = vadd.f32 0.0, %v1409
        %v1411 = vpop.f32.mrb[0].mxu0
        %v1412 = vadd.f32 0.0, %v1411
        %1413 = vdwg.mxu0
        %v1414 = vadd.f32 %v1330, %v1410
        %v1415 = vadd.f32 %v1331, %v1412
        %v1416 = vadd.f32 %v1414, %v759
        %v1417 = vadd.f32 %v1415, %v759
        %v1420 = vcombine.low %v1416, %v1417
        %s1422 = scalar_lea.vmem %s242, 16 [#allocation8]
        %1423 = vst [vmem:[%s1422] sm:$0xff] %v1420
        %s1424 = scalar_lea.vmem [#allocation5], 48
        %v1425 = vld [vmem:[%s1424] sm:$0xf]
        %s1426 = scalar_lea.vmem [#allocation5], 52
        %v1427 = vld [vmem:[%s1426] sm:$0xf]
        %v1429 = vsel %vm428, %v1427, 0
        %1431 = vmatprep.subr.mxu0 %v1013
        %1432 = vmatpush1.msra.mxu0 %v1010
        %1433 = vmatprep.subr.mxu0 0.0
        %1434 = vmatpush1.msra.mxu0 0.0
        %1435 = vmatprep.subr.mxu0 0.0
        %1436 = vmatpush1.msra.mxu0 0.0
        %1437 = vmatprep.subr.mxu0 0.0
        %1438 = vmatpush1.msra.mxu0 0.0
        %1439 = vmatprep.subr.mxu0 0.0
        %1440 = vmatpush1.msra.mxu0 0.0
        %1441 = vmatprep.subr.mxu0 0.0
        %1442 = vmatpush1.msra.mxu0 0.0
        %1443 = vmatprep.subr.mxu0 0.0
        %1444 = vmatpush1.msra.mxu0 0.0
        %1445 = vmatprep.subr.mxu0 0.0
        %1446 = vmatpush1.msra.mxu0 0.0
        %1447 = vmatprep.subr.mxu0 0.0
        %1448 = vmatpush1.msra.mxu0 0.0
        %1449 = vmatprep.subr.mxu0 0.0
        %1450 = vmatpush1.msra.mxu0 0.0
        %1451 = vmatprep.subr.mxu0 0.0
        %1452 = vmatpush1.msra.mxu0 0.0
        %1453 = vmatprep.subr.mxu0 0.0
        %1454 = vmatpush1.msra.mxu0 0.0
        %1455 = vmatprep.subr.mxu0 0.0
        %1456 = vmatpush1.msra.mxu0 0.0
        %1457 = vmatprep.subr.mxu0 0.0
        %1458 = vmatpush1.msra.mxu0 0.0
        %1459 = vmatprep.subr.mxu0 0.0
        %1460 = vmatpush1.msra.mxu0 0.0
        %1461 = vmatprep.subr.mxu0 0.0
        %1462 = vmatpush1.msra.mxu0 0.0
        %1463 = vmatprep.subr.mxu0 0.0
        %1464 = vmatpush1.msra.mxu0 0.0
        %1465 = vmatprep.subr.mxu0 0.0
        %1466 = vmatpush1.msra.mxu0 0.0
        %1467 = vmatprep.subr.mxu0 0.0
        %1468 = vmatpush1.msra.mxu0 0.0
        %1469 = vmatprep.subr.mxu0 0.0
        %1470 = vmatpush1.msra.mxu0 0.0
        %1471 = vmatprep.subr.mxu0 0.0
        %1472 = vmatpush1.msra.mxu0 0.0
        %1473 = vmatprep.subr.mxu0 0.0
        %1474 = vmatpush1.msra.mxu0 0.0
        %1475 = vmatprep.subr.mxu0 0.0
        %1476 = vmatpush1.msra.mxu0 0.0
        %1477 = vmatprep.subr.mxu0 0.0
        %1478 = vmatpush1.msra.mxu0 0.0
        %1479 = vmatprep.subr.mxu0 0.0
        %1480 = vmatpush1.msra.mxu0 0.0
        %1481 = vmatprep.subr.mxu0 0.0
        %1482 = vmatpush1.msra.mxu0 0.0
        %1483 = vmatprep.subr.mxu0 0.0
        %1484 = vmatpush1.msra.mxu0 0.0
        %1485 = vmatprep.subr.mxu0 0.0
        %1486 = vmatpush1.msra.mxu0 0.0
        %1487 = vmatprep.subr.mxu0 0.0
        %1488 = vmatpush1.msra.mxu0 0.0
        %1489 = vmatprep.subr.mxu0 0.0
        %1490 = vmatpush1.msra.mxu0 0.0
        %1491 = vmatprep.subr.mxu0 0.0
        %1492 = vmatpush1.msra.mxu0 0.0
        %1493 = vmatprep.subr.mxu0 0.0
        %1494 = vmatpush1.msra.mxu0 0.0
        %1495 = vmatprep.mubr.f32.mxu0 0.0
        %1496 = vmatmul.mubr.f32.gmra.mrb[0].mxu0 %v1429
        %v1497 = vpop.f32.mrb[0].mxu0
        %v1498 = vadd.f32 0.0, %v1497
        %v1499 = vpop.f32.mrb[0].mxu0
        %v1500 = vadd.f32 0.0, %v1499
        %1501 = vdwg.mxu0
        %v1503 = vsel %vm428, %v1425, 0
        %1505 = vmatprep.subr.mxu0 %v681
        %1506 = vmatpush1.msra.mxu0 %v679
        %1507 = vmatprep.subr.mxu0 0.0
        %1508 = vmatpush1.msra.mxu0 0.0
        %1509 = vmatprep.subr.mxu0 0.0
        %1510 = vmatpush1.msra.mxu0 0.0
        %1511 = vmatprep.subr.mxu0 0.0
        %1512 = vmatpush1.msra.mxu0 0.0
        %1513 = vmatprep.subr.mxu0 0.0
        %1514 = vmatpush1.msra.mxu0 0.0
        %1515 = vmatprep.subr.mxu0 0.0
        %1516 = vmatpush1.msra.mxu0 0.0
        %1517 = vmatprep.subr.mxu0 0.0
        %1518 = vmatpush1.msra.mxu0 0.0
        %1519 = vmatprep.subr.mxu0 0.0
        %1520 = vmatpush1.msra.mxu0 0.0
        %1521 = vmatprep.subr.mxu0 0.0
        %1522 = vmatpush1.msra.mxu0 0.0
        %1523 = vmatprep.subr.mxu0 0.0
        %1524 = vmatpush1.msra.mxu0 0.0
        %1525 = vmatprep.subr.mxu0 0.0
        %1526 = vmatpush1.msra.mxu0 0.0
        %1527 = vmatprep.subr.mxu0 0.0
        %1528 = vmatpush1.msra.mxu0 0.0
        %1529 = vmatprep.subr.mxu0 0.0
        %1530 = vmatpush1.msra.mxu0 0.0
        %1531 = vmatprep.subr.mxu0 0.0
        %1532 = vmatpush1.msra.mxu0 0.0
        %1533 = vmatprep.subr.mxu0 0.0
        %1534 = vmatpush1.msra.mxu0 0.0
        %1535 = vmatprep.subr.mxu0 0.0
        %1536 = vmatpush1.msra.mxu0 0.0
        %1537 = vmatprep.subr.mxu0 0.0
        %1538 = vmatpush1.msra.mxu0 0.0
        %1539 = vmatprep.subr.mxu0 0.0
        %1540 = vmatpush1.msra.mxu0 0.0
        %1541 = vmatprep.subr.mxu0 0.0
        %1542 = vmatpush1.msra.mxu0 0.0
        %1543 = vmatprep.subr.mxu0 0.0
        %1544 = vmatpush1.msra.mxu0 0.0
        %1545 = vmatprep.subr.mxu0 0.0
        %1546 = vmatpush1.msra.mxu0 0.0
        %1547 = vmatprep.subr.mxu0 0.0
        %1548 = vmatpush1.msra.mxu0 0.0
        %1549 = vmatprep.subr.mxu0 0.0
        %1550 = vmatpush1.msra.mxu0 0.0
        %1551 = vmatprep.subr.mxu0 0.0
        %1552 = vmatpush1.msra.mxu0 0.0
        %1553 = vmatprep.subr.mxu0 0.0
        %1554 = vmatpush1.msra.mxu0 0.0
        %1555 = vmatprep.subr.mxu0 0.0
        %1556 = vmatpush1.msra.mxu0 0.0
        %1557 = vmatprep.subr.mxu0 0.0
        %1558 = vmatpush1.msra.mxu0 0.0
        %1559 = vmatprep.subr.mxu0 0.0
        %1560 = vmatpush1.msra.mxu0 0.0
        %1561 = vmatprep.subr.mxu0 0.0
        %1562 = vmatpush1.msra.mxu0 0.0
        %1563 = vmatprep.subr.mxu0 0.0
        %1564 = vmatpush1.msra.mxu0 0.0
        %1565 = vmatprep.subr.mxu0 0.0
        %1566 = vmatpush1.msra.mxu0 0.0
        %1567 = vmatprep.subr.mxu0 0.0
        %1568 = vmatpush1.msra.mxu0 0.0
        %1569 = vmatprep.mubr.f32.mxu0 0.0
        %1570 = vmatmul.mubr.f32.gmra.mrb[0].mxu0 %v1503
        %v1571 = vpop.f32.mrb[0].mxu0
        %v1572 = vadd.f32 %v1498, %v1571
        %v1573 = vpop.f32.mrb[0].mxu0
        %v1574 = vadd.f32 %v1500, %v1573
        %1575 = vdwg.mxu0
        %s1576 = scalar_lea.vmem [#allocation5], 56
        %v1577 = vld [vmem:[%s1576] sm:$0xf]
        %v1579 = vsel %vm428, %v1577, 0
        %1581 = vmatprep.subr.mxu0 %v1341
        %1582 = vmatpush1.msra.mxu0 %v1338
        %1583 = vmatprep.subr.mxu0 0.0
        %1584 = vmatpush1.msra.mxu0 0.0
        %1585 = vmatprep.subr.mxu0 0.0
        %1586 = vmatpush1.msra.mxu0 0.0
        %1587 = vmatprep.subr.mxu0 0.0
        %1588 = vmatpush1.msra.mxu0 0.0
        %1589 = vmatprep.subr.mxu0 0.0
        %1590 = vmatpush1.msra.mxu0 0.0
        %1591 = vmatprep.subr.mxu0 0.0
        %1592 = vmatpush1.msra.mxu0 0.0
        %1593 = vmatprep.subr.mxu0 0.0
        %1594 = vmatpush1.msra.mxu0 0.0
        %1595 = vmatprep.subr.mxu0 0.0
        %1596 = vmatpush1.msra.mxu0 0.0
        %1597 = vmatprep.subr.mxu0 0.0
        %1598 = vmatpush1.msra.mxu0 0.0
        %1599 = vmatprep.subr.mxu0 0.0
        %1600 = vmatpush1.msra.mxu0 0.0
        %1601 = vmatprep.subr.mxu0 0.0
        %1602 = vmatpush1.msra.mxu0 0.0
        %1603 = vmatprep.subr.mxu0 0.0
        %1604 = vmatpush1.msra.mxu0 0.0
        %1605 = vmatprep.subr.mxu0 0.0
        %1606 = vmatpush1.msra.mxu0 0.0
        %1607 = vmatprep.subr.mxu0 0.0
        %1608 = vmatpush1.msra.mxu0 0.0
        %1609 = vmatprep.subr.mxu0 0.0
        %1610 = vmatpush1.msra.mxu0 0.0
        %1611 = vmatprep.subr.mxu0 0.0
        %1612 = vmatpush1.msra.mxu0 0.0
        %1613 = vmatprep.subr.mxu0 0.0
        %1614 = vmatpush1.msra.mxu0 0.0
        %1615 = vmatprep.subr.mxu0 0.0
        %1616 = vmatpush1.msra.mxu0 0.0
        %1617 = vmatprep.subr.mxu0 0.0
        %1618 = vmatpush1.msra.mxu0 0.0
        %1619 = vmatprep.subr.mxu0 0.0
        %1620 = vmatpush1.msra.mxu0 0.0
        %1621 = vmatprep.subr.mxu0 0.0
        %1622 = vmatpush1.msra.mxu0 0.0
        %1623 = vmatprep.subr.mxu0 0.0
        %1624 = vmatpush1.msra.mxu0 0.0
        %1625 = vmatprep.subr.mxu0 0.0
        %1626 = vmatpush1.msra.mxu0 0.0
        %1627 = vmatprep.subr.mxu0 0.0
        %1628 = vmatpush1.msra.mxu0 0.0
        %1629 = vmatprep.subr.mxu0 0.0
        %1630 = vmatpush1.msra.mxu0 0.0
        %1631 = vmatprep.subr.mxu0 0.0
        %1632 = vmatpush1.msra.mxu0 0.0
        %1633 = vmatprep.subr.mxu0 0.0
        %1634 = vmatpush1.msra.mxu0 0.0
        %1635 = vmatprep.subr.mxu0 0.0
        %1636 = vmatpush1.msra.mxu0 0.0
        %1637 = vmatprep.subr.mxu0 0.0
        %1638 = vmatpush1.msra.mxu0 0.0
        %1639 = vmatprep.subr.mxu0 0.0
        %1640 = vmatpush1.msra.mxu0 0.0
        %1641 = vmatprep.subr.mxu0 0.0
        %1642 = vmatpush1.msra.mxu0 0.0
        %1643 = vmatprep.subr.mxu0 0.0
        %1644 = vmatpush1.msra.mxu0 0.0
        %1645 = vmatprep.mubr.f32.mxu0 0.0
        %1646 = vmatmul.mubr.f32.gmra.mrb[0].mxu0 %v1579
        %v1647 = vpop.f32.mrb[0].mxu0
        %v1648 = vadd.f32 0.0, %v1647
        %v1649 = vpop.f32.mrb[0].mxu0
        %v1650 = vadd.f32 0.0, %v1649
        %1651 = vdwg.mxu0
        %v1652 = vadd.f32 %v1572, %v1648
        %v1653 = vadd.f32 %v1574, %v1650
        %s1654 = scalar_lea.vmem [#allocation5], 60
        %v1655 = vld [vmem:[%s1654] sm:$0xf]
        %v1657 = vsel %vm428, %v1655, 0
        %v1660 = vsel %vm432, %v423, 0
        %v1663 = vsel %vm432, %v424, 0
        %1665 = vmatprep.subr.mxu0 %v1663
        %1666 = vmatpush1.msra.mxu0 %v1660
        %1667 = vmatprep.subr.mxu0 0.0
        %1668 = vmatpush1.msra.mxu0 0.0
        %1669 = vmatprep.subr.mxu0 0.0
        %1670 = vmatpush1.msra.mxu0 0.0
        %1671 = vmatprep.subr.mxu0 0.0
        %1672 = vmatpush1.msra.mxu0 0.0
        %1673 = vmatprep.subr.mxu0 0.0
        %1674 = vmatpush1.msra.mxu0 0.0
        %1675 = vmatprep.subr.mxu0 0.0
        %1676 = vmatpush1.msra.mxu0 0.0
        %1677 = vmatprep.subr.mxu0 0.0
        %1678 = vmatpush1.msra.mxu0 0.0
        %1679 = vmatprep.subr.mxu0 0.0
        %1680 = vmatpush1.msra.mxu0 0.0
        %1681 = vmatprep.subr.mxu0 0.0
        %1682 = vmatpush1.msra.mxu0 0.0
        %1683 = vmatprep.subr.mxu0 0.0
        %1684 = vmatpush1.msra.mxu0 0.0
        %1685 = vmatprep.subr.mxu0 0.0
        %1686 = vmatpush1.msra.mxu0 0.0
        %1687 = vmatprep.subr.mxu0 0.0
        %1688 = vmatpush1.msra.mxu0 0.0
        %1689 = vmatprep.subr.mxu0 0.0
        %1690 = vmatpush1.msra.mxu0 0.0
        %1691 = vmatprep.subr.mxu0 0.0
        %1692 = vmatpush1.msra.mxu0 0.0
        %1693 = vmatprep.subr.mxu0 0.0
        %1694 = vmatpush1.msra.mxu0 0.0
        %1695 = vmatprep.subr.mxu0 0.0
        %1696 = vmatpush1.msra.mxu0 0.0
        %1697 = vmatprep.subr.mxu0 0.0
        %1698 = vmatpush1.msra.mxu0 0.0
        %1699 = vmatprep.subr.mxu0 0.0
        %1700 = vmatpush1.msra.mxu0 0.0
        %1701 = vmatprep.subr.mxu0 0.0
        %1702 = vmatpush1.msra.mxu0 0.0
        %1703 = vmatprep.subr.mxu0 0.0
        %1704 = vmatpush1.msra.mxu0 0.0
        %1705 = vmatprep.subr.mxu0 0.0
        %1706 = vmatpush1.msra.mxu0 0.0
        %1707 = vmatprep.subr.mxu0 0.0
        %1708 = vmatpush1.msra.mxu0 0.0
        %1709 = vmatprep.subr.mxu0 0.0
        %1710 = vmatpush1.msra.mxu0 0.0
        %1711 = vmatprep.subr.mxu0 0.0
        %1712 = vmatpush1.msra.mxu0 0.0
        %1713 = vmatprep.subr.mxu0 0.0
        %1714 = vmatpush1.msra.mxu0 0.0
        %1715 = vmatprep.subr.mxu0 0.0
        %1716 = vmatpush1.msra.mxu0 0.0
        %1717 = vmatprep.subr.mxu0 0.0
        %1718 = vmatpush1.msra.mxu0 0.0
        %1719 = vmatprep.subr.mxu0 0.0
        %1720 = vmatpush1.msra.mxu0 0.0
        %1721 = vmatprep.subr.mxu0 0.0
        %1722 = vmatpush1.msra.mxu0 0.0
        %1723 = vmatprep.subr.mxu0 0.0
        %1724 = vmatpush1.msra.mxu0 0.0
        %1725 = vmatprep.subr.mxu0 0.0
        %1726 = vmatpush1.msra.mxu0 0.0
        %1727 = vmatprep.subr.mxu0 0.0
        %1728 = vmatpush1.msra.mxu0 0.0
        %1729 = vmatprep.mubr.f32.mxu0 0.0
        %1730 = vmatmul.mubr.f32.gmra.mrb[0].mxu0 %v1657
        %v1731 = vpop.f32.mrb[0].mxu0
        %v1732 = vadd.f32 0.0, %v1731
        %v1733 = vpop.f32.mrb[0].mxu0
        %v1734 = vadd.f32 0.0, %v1733
        %1735 = vdwg.mxu0
        %v1736 = vadd.f32 %v1652, %v1732
        %v1737 = vadd.f32 %v1653, %v1734
        %v1738 = vadd.f32 %v1736, %v759
        %v1739 = vadd.f32 %v1737, %v759
        %v1742 = vcombine.low %v1738, %v1739
        %s1744 = scalar_lea.vmem %s242, 24 [#allocation8]
        %1745 = vst [vmem:[%s1744] sm:$0xff] %v1742
        %s1746 = sand.u32 %s119, 1
        %s1747 = scalar_lea.sflag [#allocation4], %s1746
        %s1748 = sand.u32 %s119, 1
        %s1749 = smul.addr %s1748, 32
        %s1750 = scalar_lea.vmem [#allocation8], %s1749
        // Predicated region
        $region49: #{tpu_custom_call.1} parent=35 // pred_check
          %p1751 = pneg %p129
        $region50: #{tpu_custom_call.1} parent=35 // pred_check_branch
          %1753 = sbr.rel (%p1751) target = $region52
        $region51: #{tpu_custom_call.1} parent=35 // pred_region
          %s1755 = ssub.s32 512, 512
          %1756 = vsyncadd %s1747, %s1755
          %s1757 = smul.addr %s22, 8
          %s1758 = smul.addr %s1757, 64
          %s1759 = scalar_lea.hbm %s4, %s1758
          %s1760 = sshll.u32 %s1750, 4
          %s1761 = int_to_ptr.vmem [resolvable:$true] %s1760
          %1766 = dma.vmem_to_hbm [thread:$0]  %s1761, 512, %s1759, %s1747, 128, 128, 8
        $region52: #{tpu_custom_call.1} parent=35 // pred_fallthru
          _
      $region36: #{tpu_custom_call.1} parent=5 // pred_fallthru
        _
      %p1767 = scmp.le.s32.totalorder 2, %s17
      // Predicated region
      $region53: #{tpu_custom_call.1} parent=5 // pred_check
        %p1768 = pneg %p1767
      $region54: #{tpu_custom_call.1} parent=5 // pred_check_branch
        %1770 = sbr.rel (%p1768) target = $region56
      $region55: #{tpu_custom_call.1} parent=5 // pred_region
        %s1771 = ssub.s32 %s17, 2
        // Predicated region
        $region57: #{tpu_custom_call.1} parent=55 // pred_check
          %p1772 = pneg %p135
        $region58: #{tpu_custom_call.1} parent=55 // pred_check_branch
          %1774 = sbr.rel (%p1772) target = $region60
        $region59: #{tpu_custom_call.1} parent=55 // pred_region
          %s1775 = sand.u32 %s120, 1
          %s1776 = scalar_lea.sflag [#allocation4], %s1775
          %s1777 = sand.u32 %s120, 1
          %s1778 = smul.addr %s1777, 32
          %s1779 = scalar_lea.vmem [#allocation8], %s1778
          %1780 = dma.done %s1776, 512
        $region60: #{tpu_custom_call.1} parent=55 // pred_fallthru
          _
      $region56: #{tpu_custom_call.1} parent=5 // pred_fallthru
        _
    $region6: #{tpu_custom_call.1} parent=1 // loop_footer
      %s21 = sadd.s32 1, %s17
    $region7: #{tpu_custom_call.1} parent=1 // loop_footer_branch
      %16 = sbr.rel target = $region3
    $region8: #{tpu_custom_call.1} parent=1 // loop_exit
      _
    %1781 = vsyncpa [#allocation3], 1
    %s1782 = scalar_lea.sflag [#allocation3], 1
    %1783 = vsyncpa %s1782, 1
    %1784 = vsyncpa [#allocation6], 1
    %1785 = vsyncpa [#allocation4], 1
    %s1786 = scalar_lea.sflag [#allocation4], 1
    %1787 = vsyncpa %s1786, 1

</llo_original>
